<compile_context>
chip_gen: v5e
topology: v5e:2x2
jax: 0.10.0
libtpu: 0.0.40
codegen_flags: <defaults>
</compile_context>

<pallas_src>
import functools

import jax
import jax.numpy as jnp
from jax import lax
from jax.experimental import pallas as pl
from jax.experimental.pallas import tpu as pltpu

HIDDEN = 768
NUM_CLASSES = 2
PADDED_CLASSES = 128          # lane-dense output width; real logits = [:, :2]
DROP_P = 0.25


def _head_kernel(*refs, train: bool, drop_p: float):
    """One batch tile: x_cls (bm,768) -> padded logits (bm,128)."""
    if train:
        x_ref, u_ref, w1_ref, b1_ref, w2_ref, b2_ref, out_ref = refs
    else:
        x_ref, w1_ref, b1_ref, w2_ref, b2_ref, out_ref = refs
        u_ref = None

    x = x_ref[...]                                           # (bm, 768) f32 CLS rows

    # fc[0]: Linear(768, 768) — bf16 MXU inputs, f32 accumulation.
    h = jnp.dot(x.astype(jnp.bfloat16), w1_ref[...],
                preferred_element_type=jnp.float32) + b1_ref[...]

    # fc[1]: exact (erf-based) GELU in f32, matching torch.nn.GELU() default.
    h = 0.5 * h * (1.0 + lax.erf(h * jnp.float32(0.7071067811865476)))

    # fc[2]: Dropout(p=0.25). Identity in eval; inverted-dropout scaling in train.
    if train:
        keep = u_ref[...] >= jnp.float32(drop_p)
        h = jnp.where(keep, h * jnp.float32(1.0 / (1.0 - drop_p)), jnp.float32(0.0))

    # fc[3]: Linear(768, 2), zero-padded to 128 output lanes (lane-dense store).
    logits = jnp.dot(h.astype(jnp.bfloat16), w2_ref[...],
                     preferred_element_type=jnp.float32) + b2_ref[...]
    out_ref[...] = logits.astype(out_ref.dtype)


def sentinel_head(x2d, kparams, *, train=False, rng_key=None, drop_p=DROP_P):
    """x2d: (B, S*H) row-major view of last_hidden_state; CLS = columns [0, H)."""
    B, SH = x2d.shape
    assert SH % HIDDEN == 0

    # Batch tiling: whole batch in one tile while small; 128-row tiles otherwise.
    bm = B if B <= 128 else 128
    assert B % bm == 0 and (bm == B or bm % 8 == 0), "batch must tile into 128-row blocks"
    grid = (B // bm,)

    w1, b1, w2p, b2p = kparams["w1"], kparams["b1"], kparams["w2p"], kparams["b2p"]

    row_spec = pl.BlockSpec((bm, HIDDEN), lambda i: (i, 0))      # CLS slice per tile
    def const_spec(shape):
        return pl.BlockSpec(shape, lambda i: (0, 0))             # resident across tiles

    in_specs = [row_spec]
    args = [x2d]
    if train:
        if rng_key is None:
            rng_key = jax.random.PRNGKey(0)
        u = jax.random.uniform(rng_key, (B, HIDDEN), jnp.float32)
        in_specs.append(pl.BlockSpec((bm, HIDDEN), lambda i: (i, 0)))
        args.append(u)
    in_specs += [const_spec(w1.shape), const_spec(b1.shape),
                 const_spec(w2p.shape), const_spec(b2p.shape)]
    args += [w1, b1, w2p, b2p]

    kernel = functools.partial(_head_kernel, train=train, drop_p=drop_p)

    out_padded = pl.pallas_call(
        kernel,
        out_shape=jax.ShapeDtypeStruct((B, PADDED_CLASSES), jnp.float32),
        grid=grid,
        in_specs=in_specs,
        out_specs=pl.BlockSpec((bm, PADDED_CLASSES), lambda i: (i, 0)),
        compiler_params=pltpu.CompilerParams(
            dimension_semantics=("parallel",)),      # batch tiles split across TCs (v7x)
    )(*args)

    return out_padded[:, :NUM_CLASSES]


def sentinel_forward(last_hidden_state, kparams, *, train=False, rng_key=None):
    """Mirror of Sentinel.forward given RoBERTa's last_hidden_state (B, S, H)."""
    B, S, H = last_hidden_state.shape
    assert H == HIDDEN
    # Metadata-only reshape: CLS token = columns [0, HIDDEN) of each (S*H) row.
    x2d = last_hidden_state.reshape(B, S * H)
    return sentinel_head(x2d, kparams, train=train, rng_key=rng_key)


def init_params(key):
    """torch.nn.Linear default init (U[-1/sqrt(fan_in), 1/sqrt(fan_in)]), f32 masters."""
    k1, k2, k3, k4 = jax.random.split(key, 4)
    bound = 1.0 / jnp.sqrt(HIDDEN)
    w1 = jax.random.uniform(k1, (HIDDEN, HIDDEN), jnp.float32, -bound, bound)
    b1 = jax.random.uniform(k2, (HIDDEN,), jnp.float32, -bound, bound)
    w2 = jax.random.uniform(k3, (HIDDEN, NUM_CLASSES), jnp.float32, -bound, bound)
    b2 = jax.random.uniform(k4, (NUM_CLASSES,), jnp.float32, -bound, bound)
    return {"w1": w1, "b1": b1, "w2": w2, "b2": b2}


def prepare_params(params):
    """One-time cast/pad to the kernel's layout: bf16 weights, 128-lane output pad."""
    w1 = params["w1"].astype(jnp.bfloat16)
    b1 = params["b1"].reshape(1, HIDDEN).astype(jnp.float32)
    w2p = jnp.zeros((HIDDEN, PADDED_CLASSES), jnp.bfloat16)
    w2p = w2p.at[:, :NUM_CLASSES].set(params["w2"].astype(jnp.bfloat16))
    b2p = jnp.zeros((1, PADDED_CLASSES), jnp.float32)
    b2p = b2p.at[0, :NUM_CLASSES].set(params["b2"].astype(jnp.float32))
    return {"w1": w1, "b1": b1, "w2p": w2p, "b2p": b2p}


if __name__ == "__main__":
    key = jax.random.PRNGKey(0)
    k_params, k_hidden, k_drop = jax.random.split(key, 3)

    B, S = 8, 8   # small demo batch / seq; hidden=768 is fixed by the module
    params = init_params(k_params)
    kparams = prepare_params(params)          # cast/pad once, reused every call

    # Synthetic stand-in for roberta(**encodedText).last_hidden_state
    last_hidden_state = jax.random.normal(k_hidden, (B, S, HIDDEN), jnp.float32)

    # Eval-mode forward (dropout = identity), matching module.eval() semantics.
    logits_eval = sentinel_forward(last_hidden_state, kparams, train=False)
    # Train-mode forward exercises the fused dropout path with a fresh key.
    logits_train = sentinel_forward(last_hidden_state, kparams, train=True, rng_key=k_drop)

    jax.block_until_ready(logits_eval)
    jax.block_until_ready(logits_train)

    assert logits_eval.shape == (B, NUM_CLASSES)
    assert logits_train.shape == (B, NUM_CLASSES)
    assert bool(jnp.all(jnp.isfinite(logits_eval)))
    assert bool(jnp.all(jnp.isfinite(logits_train)))
    print("KERNEL_OK")
</pallas_src>

<mosaic_0001>
module attributes {stable_mosaic.version = 11 : i64} {
  func.func @_head_kernel(%arg0: i32, %arg1: memref<8x768xf32, #tpu.memory_space<vmem>>, %arg2: memref<768x768xbf16, #tpu.memory_space<vmem>>, %arg3: memref<1x768xf32, #tpu.memory_space<vmem>>, %arg4: memref<768x128xbf16, #tpu.memory_space<vmem>>, %arg5: memref<1x128xf32, #tpu.memory_space<vmem>>, %arg6: memref<8x128xf32, #tpu.memory_space<vmem>>) attributes {dimension_semantics = [#tpu.dimension_semantics<parallel>], iteration_bounds = array<i64: 1>, scalar_prefetch = 0 : i64, scratch_operands = 0 : i64, tpu.core_type = #tpu.core_type<tc>, window_params = [{transform_indices = @transform_0, window_bounds = array<i64: 8, 768>}, {pipeline_mode = #tpu.pipeline_mode<synchronous>, transform_indices = @transform_1, window_bounds = array<i64: 768, 768>}, {pipeline_mode = #tpu.pipeline_mode<synchronous>, transform_indices = @transform_2, window_bounds = array<i64: 1, 768>}, {pipeline_mode = #tpu.pipeline_mode<synchronous>, transform_indices = @transform_3, window_bounds = array<i64: 768, 128>}, {pipeline_mode = #tpu.pipeline_mode<synchronous>, transform_indices = @transform_4, window_bounds = array<i64: 1, 128>}, {transform_indices = @transform_5, window_bounds = array<i64: 8, 128>}]} {
    %c0 = arith.constant 0 : index
    %c0_0 = arith.constant 0 : index
    %0 = vector.load %arg1[%c0, %c0_0] : memref<8x768xf32, #tpu.memory_space<vmem>>, vector<8x768xf32>
    %1 = arith.truncf %0 : vector<8x768xf32> to vector<8x768xbf16>
    %c0_1 = arith.constant 0 : index
    %c0_2 = arith.constant 0 : index
    %2 = vector.load %arg2[%c0_1, %c0_2] : memref<768x768xbf16, #tpu.memory_space<vmem>>, vector<768x768xbf16>
    %cst = arith.constant dense<0.000000e+00> : vector<8x768xf32>
    %3 = tpu.matmul %1, %2, %cst {dimension_numbers = #tpu.dot_dimension_numbers<[1], [0], [0], [1], [0, 0, 1, 1], [], []>} : vector<8x768xbf16>, vector<768x768xbf16>, vector<8x768xf32> -> vector<8x768xf32>
    %c0_3 = arith.constant 0 : index
    %c0_4 = arith.constant 0 : index
    %4 = vector.load %arg3[%c0_3, %c0_4] : memref<1x768xf32, #tpu.memory_space<vmem>>, vector<1x768xf32>
    %5 = vector.broadcast %4 : vector<1x768xf32> to vector<8x768xf32>
    %6 = arith.addf %3, %5 : vector<8x768xf32>
    %cst_5 = arith.constant 5.000000e-01 : f32
    %7 = vector.broadcast %cst_5 : f32 to vector<8x768xf32>
    %8 = arith.mulf %7, %6 : vector<8x768xf32>
    %cst_6 = arith.constant 0.707106769 : f32
    %9 = vector.broadcast %cst_6 : f32 to vector<8x768xf32>
    %10 = arith.mulf %6, %9 : vector<8x768xf32>
    %11 = math.erf %10 : vector<8x768xf32>
    %cst_7 = arith.constant 1.000000e+00 : f32
    %12 = vector.broadcast %cst_7 : f32 to vector<8x768xf32>
    %13 = arith.addf %12, %11 : vector<8x768xf32>
    %14 = arith.mulf %8, %13 : vector<8x768xf32>
    %15 = arith.truncf %14 : vector<8x768xf32> to vector<8x768xbf16>
    %c0_8 = arith.constant 0 : index
    %c0_9 = arith.constant 0 : index
    %16 = vector.load %arg4[%c0_8, %c0_9] : memref<768x128xbf16, #tpu.memory_space<vmem>>, vector<768x128xbf16>
    %cst_10 = arith.constant dense<0.000000e+00> : vector<8x128xf32>
    %17 = tpu.matmul %15, %16, %cst_10 {dimension_numbers = #tpu.dot_dimension_numbers<[1], [0], [0], [1], [0, 0, 1, 1], [], []>} : vector<8x768xbf16>, vector<768x128xbf16>, vector<8x128xf32> -> vector<8x128xf32>
    %c0_11 = arith.constant 0 : index
    %c0_12 = arith.constant 0 : index
    %18 = vector.load %arg5[%c0_11, %c0_12] : memref<1x128xf32, #tpu.memory_space<vmem>>, vector<1x128xf32>
    %19 = vector.broadcast %18 : vector<1x128xf32> to vector<8x128xf32>
    %20 = arith.addf %17, %19 : vector<8x128xf32>
    %c0_13 = arith.constant 0 : index
    %c0_14 = arith.constant 0 : index
    %21 = vector.load %arg6[%c0_13, %c0_14] : memref<8x128xf32, #tpu.memory_space<vmem>>, vector<8x128xf32>
    tpu.vector_store %arg6[%c0_13, %c0_14], %20 {strides = array<i32>} : memref<8x128xf32, #tpu.memory_space<vmem>>, vector<8x128xf32>,
    return
  }
  func.func @transform_0(%arg0: i32) -> (i32, i32) {
    %c0_i32 = arith.constant 0 : i32
    %c0_i32_0 = arith.constant 0 : i32
    return %arg0, %c0_i32 : i32, i32
  }
  func.func @transform_1(%arg0: i32) -> (i32, i32) {
    %c0_i32 = arith.constant 0 : i32
    %c0_i32_0 = arith.constant 0 : i32
    %c0_i32_1 = arith.constant 0 : i32
    return %c0_i32, %c0_i32_0 : i32, i32
  }
  func.func @transform_2(%arg0: i32) -> (i32, i32) {
    %c0_i32 = arith.constant 0 : i32
    %c0_i32_0 = arith.constant 0 : i32
    %c0_i32_1 = arith.constant 0 : i32
    return %c0_i32, %c0_i32_0 : i32, i32
  }
  func.func @transform_3(%arg0: i32) -> (i32, i32) {
    %c0_i32 = arith.constant 0 : i32
    %c0_i32_0 = arith.constant 0 : i32
    %c0_i32_1 = arith.constant 0 : i32
    return %c0_i32, %c0_i32_0 : i32, i32
  }
  func.func @transform_4(%arg0: i32) -> (i32, i32) {
    %c0_i32 = arith.constant 0 : i32
    %c0_i32_0 = arith.constant 0 : i32
    %c0_i32_1 = arith.constant 0 : i32
    return %c0_i32, %c0_i32_0 : i32, i32
  }
  func.func @transform_5(%arg0: i32) -> (i32, i32) {
    %c0_i32 = arith.constant 0 : i32
    %c0_i32_0 = arith.constant 0 : i32
    return %arg0, %c0_i32 : i32, i32
  }
}

</mosaic_0001>

<llo_original>
// kernel: tpu_custom_call.1
$region0: #{tpu_custom_call.1}
  #allocation0 [shape = 'u32[]', space=smem, size = 0x4, offset = 0x4, fixed_abs, tag = 'smem constant byte address 0x4 - core index']
  #allocation1 [shape = 'u32[72,128]{1,0:T(1,128)}', space=vmem, size = 0x9000, scoped, tag = 'internal scratch']
  %s0 = inlined_call_operand.hbm [shape: f32[8,6144], index: 0, kind: input, shape index: {}]
  %s1 = inlined_call_operand.hbm [shape: bf16[768,768], index: 1, kind: input, shape index: {}]
  %s2 = inlined_call_operand.hbm [shape: f32[1,768], index: 2, kind: input, shape index: {}]
  %s3 = inlined_call_operand.hbm [shape: bf16[768,128], index: 3, kind: input, shape index: {}]
  %s4 = inlined_call_operand.hbm [shape: f32[1,128], index: 4, kind: input, shape index: {}]
  %s5 = inlined_call_operand.hbm [shape: f32[8,128], index: 5, kind: output, shape index: {}]
  %s6 = sld [smem:[#allocation0]]
  $region50: #{tpu_custom_call.1} parent=0
    _
  %s8 = ssub.s32 1, %s6
  %s9 = scalar_select 0, %s8, %s6
  $region1: #{tpu_custom_call.1} parent=0
    #allocation2 [shape = 'u8[24576]{0}', space=vmem, size = 0x6000, scoped, tag = 'input window, operand 0, single buffered']
    #allocation3 [shape = 's32[1]{0}', space=sflag, size = 0x4, scoped, tag = 'scoped memory for tpu_custom_call.1']
    #allocation4 [shape = 's32[1]{0}', space=sflag, size = 0x4, scoped, tag = 'scoped memory for tpu_custom_call.1']
    #allocation5 [shape = 'u8[1179648]{0}', space=vmem, size = 0x120000, scoped, tag = 'input window, operand 1, single buffered']
    #allocation6 [shape = 's32[1]{0}', space=sflag, size = 0x4, scoped, tag = 'scoped memory for tpu_custom_call.1']
    #allocation7 [shape = 'u8[3072]{0}', space=vmem, size = 0xc00, scoped, tag = 'input window, operand 2, single buffered']
    #allocation8 [shape = 'u8[196608]{0}', space=vmem, size = 0x30000, scoped, tag = 'input window, operand 3, single buffered']
    #allocation9 [shape = 's32[1]{0}', space=sflag, size = 0x4, scoped, tag = 'scoped memory for tpu_custom_call.1']
    #allocation10 [shape = 'u8[512]{0}', space=vmem, size = 0x400, scoped, tag = 'input window, operand 4, single buffered']
    #allocation11 [shape = 'u8[4096]{0}', space=vmem, size = 0x1000, scoped, tag = 'output window, operand 0, single buffered']
    %10 = vsyncpa [#allocation3], 0
    %11 = vsyncpa [#allocation6], 0
    %12 = vsyncpa [#allocation9], 0
    %13 = vsyncpa [#allocation4], 0
    // Predicated region
    $region2: #{tpu_custom_call.1} parent=1 // pred_check
      _
    $region3: #{tpu_custom_call.1} parent=1 // pred_check_branch
      %15 = sbr.rel (0) target = $region5
    $region4: #{tpu_custom_call.1} parent=1 // pred_region
      %17 = vsyncadd [#allocation3], 0
      %s19 = sshll.u32 %s0, 4
      %s20 = int_to_ptr.hbm [resolvable:$true] %s19
      %s21 = sshll.u32 [#allocation2], 4
      %s22 = int_to_ptr.vmem [resolvable:$true] %s21
      %24 = dma.hbm_to_vmem [thread:$0]  %s20, 768, %s22, [#allocation3]
    $region5: #{tpu_custom_call.1} parent=1 // pred_fallthru
      _
    // Predicated region
    $region6: #{tpu_custom_call.1} parent=1 // pred_check
      _
    $region7: #{tpu_custom_call.1} parent=1 // pred_check_branch
      %26 = sbr.rel (0) target = $region9
    $region8: #{tpu_custom_call.1} parent=1 // pred_region
      %28 = vsyncadd [#allocation6], 0
      %s29 = sshll.u32 %s1, 4
      %s30 = int_to_ptr.hbm [resolvable:$true] %s29
      %s31 = sshll.u32 [#allocation5], 4
      %s32 = int_to_ptr.vmem [resolvable:$true] %s31
      %37 = dma.hbm_to_vmem [thread:$0]  %s30, 36864, %s32, [#allocation6], 384, 384, 24
    $region9: #{tpu_custom_call.1} parent=1 // pred_fallthru
      _
    // Predicated region
    $region10: #{tpu_custom_call.1} parent=1 // pred_check
      _
    $region11: #{tpu_custom_call.1} parent=1 // pred_check_branch
      %39 = sbr.rel (0) target = $region13
    $region12: #{tpu_custom_call.1} parent=1 // pred_region
      %41 = vsyncadd [#allocation6], 0
      %s43 = sshll.u32 %s2, 4
      %s44 = int_to_ptr.hbm [resolvable:$true] %s43
      %s45 = sshll.u32 [#allocation7], 4
      %s46 = int_to_ptr.vmem [resolvable:$true] %s45
      %48 = dma.hbm_to_vmem [thread:$0]  %s44, 96, %s46, [#allocation6]
    $region13: #{tpu_custom_call.1} parent=1 // pred_fallthru
      _
    // Predicated region
    $region14: #{tpu_custom_call.1} parent=1 // pred_check
      _
    $region15: #{tpu_custom_call.1} parent=1 // pred_check_branch
      %50 = sbr.rel (0) target = $region17
    $region16: #{tpu_custom_call.1} parent=1 // pred_region
      %52 = vsyncadd [#allocation9], 0
      %s53 = sshll.u32 %s3, 4
      %s54 = int_to_ptr.hbm [resolvable:$true] %s53
      %s55 = sshll.u32 [#allocation8], 4
      %s56 = int_to_ptr.vmem [resolvable:$true] %s55
      %61 = dma.hbm_to_vmem [thread:$0]  %s54, 6144, %s56, [#allocation9], 64, 64, 4
    $region17: #{tpu_custom_call.1} parent=1 // pred_fallthru
      _
    // Predicated region
    $region18: #{tpu_custom_call.1} parent=1 // pred_check
      _
    $region19: #{tpu_custom_call.1} parent=1 // pred_check_branch
      %63 = sbr.rel (0) target = $region21
    $region20: #{tpu_custom_call.1} parent=1 // pred_region
      %65 = vsyncadd [#allocation9], 0
      %s67 = sshll.u32 %s4, 4
      %s68 = int_to_ptr.hbm [resolvable:$true] %s67
      %s69 = sshll.u32 [#allocation10], 4
      %s70 = int_to_ptr.vmem [resolvable:$true] %s69
      %72 = dma.hbm_to_vmem [thread:$0]  %s68, 16, %s70, [#allocation9]
    $region21: #{tpu_custom_call.1} parent=1 // pred_fallthru
      _
    // Predicated region
    $region22: #{tpu_custom_call.1} parent=1 // pred_check
      _
    $region23: #{tpu_custom_call.1} parent=1 // pred_check_branch
      %74 = sbr.rel (0) target = $region25
    $region24: #{tpu_custom_call.1} parent=1 // pred_region
      %76 = dma.done [#allocation3], 768
    $region25: #{tpu_custom_call.1} parent=1 // pred_fallthru
      _
    // Predicated region
    $region26: #{tpu_custom_call.1} parent=1 // pred_check
      _
    $region27: #{tpu_custom_call.1} parent=1 // pred_check_branch
      %78 = sbr.rel (0) target = $region29
    $region28: #{tpu_custom_call.1} parent=1 // pred_region
      %80 = dma.done [#allocation6], 36864
    $region29: #{tpu_custom_call.1} parent=1 // pred_fallthru
      _
    // Predicated region
    $region30: #{tpu_custom_call.1} parent=1 // pred_check
      _
    $region31: #{tpu_custom_call.1} parent=1 // pred_check_branch
      %82 = sbr.rel (0) target = $region33
    $region32: #{tpu_custom_call.1} parent=1 // pred_region
      %84 = dma.done [#allocation6], 96
    $region33: #{tpu_custom_call.1} parent=1 // pred_fallthru
      _
    // Predicated region
    $region34: #{tpu_custom_call.1} parent=1 // pred_check
      _
    $region35: #{tpu_custom_call.1} parent=1 // pred_check_branch
      %86 = sbr.rel (0) target = $region37
    $region36: #{tpu_custom_call.1} parent=1 // pred_region
      %88 = dma.done [#allocation9], 6144
    $region37: #{tpu_custom_call.1} parent=1 // pred_fallthru
      _
    // Predicated region
    $region38: #{tpu_custom_call.1} parent=1 // pred_check
      _
    $region39: #{tpu_custom_call.1} parent=1 // pred_check_branch
      %90 = sbr.rel (0) target = $region41
    $region40: #{tpu_custom_call.1} parent=1 // pred_region
      %92 = dma.done [#allocation9], 16
    $region41: #{tpu_custom_call.1} parent=1 // pred_fallthru
      _
    %v93 = vld [vmem:[#allocation2] sm:$0xff]
    %v94 = vld [vmem:[#allocation2 + $0x8] sm:$0xff]
    %v95 = vld [vmem:[#allocation2 + $0x10] sm:$0xff]
    %v96 = vld [vmem:[#allocation2 + $0x18] sm:$0xff]
    %v97 = vld [vmem:[#allocation2 + $0x20] sm:$0xff]
    %v98 = vld [vmem:[#allocation2 + $0x28] sm:$0xff]
    %v99 = vpack.c.bf16 %v93, %v93
    %v100 = vpack.c.bf16 %v94, %v94
    %v101 = vpack.c.bf16 %v95, %v95
    %v102 = vpack.c.bf16 %v96, %v96
    %v103 = vpack.c.bf16 %v97, %v97
    %v104 = vpack.c.bf16 %v98, %v98
    %v105 = vld [vmem:[#allocation5] sm:$0xff]
    %v106 = vld [vmem:[#allocation5 + $0x8] sm:$0xff]
    %v107 = vld [vmem:[#allocation5 + $0x10] sm:$0xff]
    %v108 = vld [vmem:[#allocation5 + $0x18] sm:$0xff]
    %v109 = vld [vmem:[#allocation5 + $0x20] sm:$0xff]
    %v110 = vld [vmem:[#allocation5 + $0x28] sm:$0xff]
    %v111 = vld [vmem:[#allocation5 + $0x30] sm:$0xff]
    %v112 = vld [vmem:[#allocation5 + $0x38] sm:$0xff]
    %v113 = vld [vmem:[#allocation5 + $0x40] sm:$0xff]
    %v114 = vld [vmem:[#allocation5 + $0x48] sm:$0xff]
    %v115 = vld [vmem:[#allocation5 + $0x50] sm:$0xff]
    %v116 = vld [vmem:[#allocation5 + $0x58] sm:$0xff]
    %v117 = vld [vmem:[#allocation5 + $0x60] sm:$0xff]
    %v118 = vld [vmem:[#allocation5 + $0x68] sm:$0xff]
    %v119 = vld [vmem:[#allocation5 + $0x70] sm:$0xff]
    %v120 = vld [vmem:[#allocation5 + $0x78] sm:$0xff]
    %v121 = vld [vmem:[#allocation5 + $0x80] sm:$0xff]
    %v122 = vld [vmem:[#allocation5 + $0x88] sm:$0xff]
    %v123 = vld [vmem:[#allocation5 + $0x90] sm:$0xff]
    %v124 = vld [vmem:[#allocation5 + $0x98] sm:$0xff]
    %v125 = vld [vmem:[#allocation5 + $0xa0] sm:$0xff]
    %v126 = vld [vmem:[#allocation5 + $0xa8] sm:$0xff]
    %v127 = vld [vmem:[#allocation5 + $0xb0] sm:$0xff]
    %v128 = vld [vmem:[#allocation5 + $0xb8] sm:$0xff]
    %v129 = vld [vmem:[#allocation5 + $0xc0] sm:$0xff]
    %v130 = vld [vmem:[#allocation5 + $0xc8] sm:$0xff]
    %v131 = vld [vmem:[#allocation5 + $0xd0] sm:$0xff]
    %v132 = vld [vmem:[#allocation5 + $0xd8] sm:$0xff]
    %v133 = vld [vmem:[#allocation5 + $0xe0] sm:$0xff]
    %v134 = vld [vmem:[#allocation5 + $0xe8] sm:$0xff]
    %v135 = vld [vmem:[#allocation5 + $0xf0] sm:$0xff]
    %v136 = vld [vmem:[#allocation5 + $0xf8] sm:$0xff]
    %v137 = vld [vmem:[#allocation5 + $0x100] sm:$0xff]
    %v138 = vld [vmem:[#allocation5 + $0x108] sm:$0xff]
    %v139 = vld [vmem:[#allocation5 + $0x110] sm:$0xff]
    %v140 = vld [vmem:[#allocation5 + $0x118] sm:$0xff]
    %v141 = vld [vmem:[#allocation5 + $0x120] sm:$0xff]
    %v142 = vld [vmem:[#allocation5 + $0x128] sm:$0xff]
    %v143 = vld [vmem:[#allocation5 + $0x130] sm:$0xff]
    %v144 = vld [vmem:[#allocation5 + $0x138] sm:$0xff]
    %v145 = vld [vmem:[#allocation5 + $0x140] sm:$0xff]
    %v146 = vld [vmem:[#allocation5 + $0x148] sm:$0xff]
    %v147 = vld [vmem:[#allocation5 + $0x150] sm:$0xff]
    %v148 = vld [vmem:[#allocation5 + $0x158] sm:$0xff]
    %v149 = vld [vmem:[#allocation5 + $0x160] sm:$0xff]
    %v150 = vld [vmem:[#allocation5 + $0x168] sm:$0xff]
    %v151 = vld [vmem:[#allocation5 + $0x170] sm:$0xff]
    %v152 = vld [vmem:[#allocation5 + $0x178] sm:$0xff]
    %v153 = vld [vmem:[#allocation5 + $0x180] sm:$0xff]
    %v154 = vld [vmem:[#allocation5 + $0x188] sm:$0xff]
    %v155 = vld [vmem:[#allocation5 + $0x190] sm:$0xff]
    %v156 = vld [vmem:[#allocation5 + $0x198] sm:$0xff]
    %v157 = vld [vmem:[#allocation5 + $0x1a0] sm:$0xff]
    %v158 = vld [vmem:[#allocation5 + $0x1a8] sm:$0xff]
    %v159 = vld [vmem:[#allocation5 + $0x1b0] sm:$0xff]
    %v160 = vld [vmem:[#allocation5 + $0x1b8] sm:$0xff]
    %v161 = vld [vmem:[#allocation5 + $0x1c0] sm:$0xff]
    %v162 = vld [vmem:[#allocation5 + $0x1c8] sm:$0xff]
    %v163 = vld [vmem:[#allocation5 + $0x1d0] sm:$0xff]
    %v164 = vld [vmem:[#allocation5 + $0x1d8] sm:$0xff]
    %v165 = vld [vmem:[#allocation5 + $0x1e0] sm:$0xff]
    %v166 = vld [vmem:[#allocation5 + $0x1e8] sm:$0xff]
    %v167 = vld [vmem:[#allocation5 + $0x1f0] sm:$0xff]
    %v168 = vld [vmem:[#allocation5 + $0x1f8] sm:$0xff]
    %v169 = vld [vmem:[#allocation5 + $0x200] sm:$0xff]
    %v170 = vld [vmem:[#allocation5 + $0x208] sm:$0xff]
    %v171 = vld [vmem:[#allocation5 + $0x210] sm:$0xff]
    %v172 = vld [vmem:[#allocation5 + $0x218] sm:$0xff]
    %v173 = vld [vmem:[#allocation5 + $0x220] sm:$0xff]
    %v174 = vld [vmem:[#allocation5 + $0x228] sm:$0xff]
    %v175 = vld [vmem:[#allocation5 + $0x230] sm:$0xff]
    %v176 = vld [vmem:[#allocation5 + $0x238] sm:$0xff]
    %v177 = vld [vmem:[#allocation5 + $0x240] sm:$0xff]
    %v178 = vld [vmem:[#allocation5 + $0x248] sm:$0xff]
    %v179 = vld [vmem:[#allocation5 + $0x250] sm:$0xff]
    %v180 = vld [vmem:[#allocation5 + $0x258] sm:$0xff]
    %v181 = vld [vmem:[#allocation5 + $0x260] sm:$0xff]
    %v182 = vld [vmem:[#allocation5 + $0x268] sm:$0xff]
    %v183 = vld [vmem:[#allocation5 + $0x270] sm:$0xff]
    %v184 = vld [vmem:[#allocation5 + $0x278] sm:$0xff]
    %v185 = vld [vmem:[#allocation5 + $0x280] sm:$0xff]
    %v186 = vld [vmem:[#allocation5 + $0x288] sm:$0xff]
    %v187 = vld [vmem:[#allocation5 + $0x290] sm:$0xff]
    %v188 = vld [vmem:[#allocation5 + $0x298] sm:$0xff]
    %v189 = vld [vmem:[#allocation5 + $0x2a0] sm:$0xff]
    %v190 = vld [vmem:[#allocation5 + $0x2a8] sm:$0xff]
    %v191 = vld [vmem:[#allocation5 + $0x2b0] sm:$0xff]
    %v192 = vld [vmem:[#allocation5 + $0x2b8] sm:$0xff]
    %v193 = vld [vmem:[#allocation5 + $0x2c0] sm:$0xff]
    %v194 = vld [vmem:[#allocation5 + $0x2c8] sm:$0xff]
    %v195 = vld [vmem:[#allocation5 + $0x2d0] sm:$0xff]
    %v196 = vld [vmem:[#allocation5 + $0x2d8] sm:$0xff]
    %v197 = vld [vmem:[#allocation5 + $0x2e0] sm:$0xff]
    %v198 = vld [vmem:[#allocation5 + $0x2e8] sm:$0xff]
    %v199 = vld [vmem:[#allocation5 + $0x2f0] sm:$0xff]
    %v200 = vld [vmem:[#allocation5 + $0x2f8] sm:$0xff]
    %v201 = vld [vmem:[#allocation5 + $0x300] sm:$0xff]
    %v202 = vld [vmem:[#allocation5 + $0x308] sm:$0xff]
    %v203 = vld [vmem:[#allocation5 + $0x310] sm:$0xff]
    %v204 = vld [vmem:[#allocation5 + $0x318] sm:$0xff]
    %v205 = vld [vmem:[#allocation5 + $0x320] sm:$0xff]
    %v206 = vld [vmem:[#allocation5 + $0x328] sm:$0xff]
    %v207 = vld [vmem:[#allocation5 + $0x330] sm:$0xff]
    %v208 = vld [vmem:[#allocation5 + $0x338] sm:$0xff]
    %v209 = vld [vmem:[#allocation5 + $0x340] sm:$0xff]
    %v210 = vld [vmem:[#allocation5 + $0x348] sm:$0xff]
    %v211 = vld [vmem:[#allocation5 + $0x350] sm:$0xff]
    %v212 = vld [vmem:[#allocation5 + $0x358] sm:$0xff]
    %v213 = vld [vmem:[#allocation5 + $0x360] sm:$0xff]
    %v214 = vld [vmem:[#allocation5 + $0x368] sm:$0xff]
    %v215 = vld [vmem:[#allocation5 + $0x370] sm:$0xff]
    %v216 = vld [vmem:[#allocation5 + $0x378] sm:$0xff]
    %v217 = vld [vmem:[#allocation5 + $0x380] sm:$0xff]
    %v218 = vld [vmem:[#allocation5 + $0x388] sm:$0xff]
    %v219 = vld [vmem:[#allocation5 + $0x390] sm:$0xff]
    %v220 = vld [vmem:[#allocation5 + $0x398] sm:$0xff]
    %v221 = vld [vmem:[#allocation5 + $0x3a0] sm:$0xff]
    %v222 = vld [vmem:[#allocation5 + $0x3a8] sm:$0xff]
    %v223 = vld [vmem:[#allocation5 + $0x3b0] sm:$0xff]
    %v224 = vld [vmem:[#allocation5 + $0x3b8] sm:$0xff]
    %v225 = vld [vmem:[#allocation5 + $0x3c0] sm:$0xff]
    %v226 = vld [vmem:[#allocation5 + $0x3c8] sm:$0xff]
    %v227 = vld [vmem:[#allocation5 + $0x3d0] sm:$0xff]
    %v228 = vld [vmem:[#allocation5 + $0x3d8] sm:$0xff]
    %v229 = vld [vmem:[#allocation5 + $0x3e0] sm:$0xff]
    %v230 = vld [vmem:[#allocation5 + $0x3e8] sm:$0xff]
    %v231 = vld [vmem:[#allocation5 + $0x3f0] sm:$0xff]
    %v232 = vld [vmem:[#allocation5 + $0x3f8] sm:$0xff]
    %v233 = vld [vmem:[#allocation5 + $0x400] sm:$0xff]
    %v234 = vld [vmem:[#allocation5 + $0x408] sm:$0xff]
    %v235 = vld [vmem:[#allocation5 + $0x410] sm:$0xff]
    %v236 = vld [vmem:[#allocation5 + $0x418] sm:$0xff]
    %v237 = vld [vmem:[#allocation5 + $0x420] sm:$0xff]
    %v238 = vld [vmem:[#allocation5 + $0x428] sm:$0xff]
    %v239 = vld [vmem:[#allocation5 + $0x430] sm:$0xff]
    %v240 = vld [vmem:[#allocation5 + $0x438] sm:$0xff]
    %v241 = vld [vmem:[#allocation5 + $0x440] sm:$0xff]
    %v242 = vld [vmem:[#allocation5 + $0x448] sm:$0xff]
    %v243 = vld [vmem:[#allocation5 + $0x450] sm:$0xff]
    %v244 = vld [vmem:[#allocation5 + $0x458] sm:$0xff]
    %v245 = vld [vmem:[#allocation5 + $0x460] sm:$0xff]
    %v246 = vld [vmem:[#allocation5 + $0x468] sm:$0xff]
    %v247 = vld [vmem:[#allocation5 + $0x470] sm:$0xff]
    %v248 = vld [vmem:[#allocation5 + $0x478] sm:$0xff]
    %v249 = vld [vmem:[#allocation5 + $0x480] sm:$0xff]
    %v250 = vld [vmem:[#allocation5 + $0x488] sm:$0xff]
    %v251 = vld [vmem:[#allocation5 + $0x490] sm:$0xff]
    %v252 = vld [vmem:[#allocation5 + $0x498] sm:$0xff]
    %v253 = vld [vmem:[#allocation5 + $0x4a0] sm:$0xff]
    %v254 = vld [vmem:[#allocation5 + $0x4a8] sm:$0xff]
    %v255 = vld [vmem:[#allocation5 + $0x4b0] sm:$0xff]
    %v256 = vld [vmem:[#allocation5 + $0x4b8] sm:$0xff]
    %v257 = vld [vmem:[#allocation5 + $0x4c0] sm:$0xff]
    %v258 = vld [vmem:[#allocation5 + $0x4c8] sm:$0xff]
    %v259 = vld [vmem:[#allocation5 + $0x4d0] sm:$0xff]
    %v260 = vld [vmem:[#allocation5 + $0x4d8] sm:$0xff]
    %v261 = vld [vmem:[#allocation5 + $0x4e0] sm:$0xff]
    %v262 = vld [vmem:[#allocation5 + $0x4e8] sm:$0xff]
    %v263 = vld [vmem:[#allocation5 + $0x4f0] sm:$0xff]
    %v264 = vld [vmem:[#allocation5 + $0x4f8] sm:$0xff]
    %v265 = vld [vmem:[#allocation5 + $0x500] sm:$0xff]
    %v266 = vld [vmem:[#allocation5 + $0x508] sm:$0xff]
    %v267 = vld [vmem:[#allocation5 + $0x510] sm:$0xff]
    %v268 = vld [vmem:[#allocation5 + $0x518] sm:$0xff]
    %v269 = vld [vmem:[#allocation5 + $0x520] sm:$0xff]
    %v270 = vld [vmem:[#allocation5 + $0x528] sm:$0xff]
    %v271 = vld [vmem:[#allocation5 + $0x530] sm:$0xff]
    %v272 = vld [vmem:[#allocation5 + $0x538] sm:$0xff]
    %v273 = vld [vmem:[#allocation5 + $0x540] sm:$0xff]
    %v274 = vld [vmem:[#allocation5 + $0x548] sm:$0xff]
    %v275 = vld [vmem:[#allocation5 + $0x550] sm:$0xff]
    %v276 = vld [vmem:[#allocation5 + $0x558] sm:$0xff]
    %v277 = vld [vmem:[#allocation5 + $0x560] sm:$0xff]
    %v278 = vld [vmem:[#allocation5 + $0x568] sm:$0xff]
    %v279 = vld [vmem:[#allocation5 + $0x570] sm:$0xff]
    %v280 = vld [vmem:[#allocation5 + $0x578] sm:$0xff]
    %v281 = vld [vmem:[#allocation5 + $0x580] sm:$0xff]
    %v282 = vld [vmem:[#allocation5 + $0x588] sm:$0xff]
    %v283 = vld [vmem:[#allocation5 + $0x590] sm:$0xff]
    %v284 = vld [vmem:[#allocation5 + $0x598] sm:$0xff]
    %v285 = vld [vmem:[#allocation5 + $0x5a0] sm:$0xff]
    %v286 = vld [vmem:[#allocation5 + $0x5a8] sm:$0xff]
    %v287 = vld [vmem:[#allocation5 + $0x5b0] sm:$0xff]
    %v288 = vld [vmem:[#allocation5 + $0x5b8] sm:$0xff]
    %v289 = vld [vmem:[#allocation5 + $0x5c0] sm:$0xff]
    %v290 = vld [vmem:[#allocation5 + $0x5c8] sm:$0xff]
    %v291 = vld [vmem:[#allocation5 + $0x5d0] sm:$0xff]
    %v292 = vld [vmem:[#allocation5 + $0x5d8] sm:$0xff]
    %v293 = vld [vmem:[#allocation5 + $0x5e0] sm:$0xff]
    %v294 = vld [vmem:[#allocation5 + $0x5e8] sm:$0xff]
    %v295 = vld [vmem:[#allocation5 + $0x5f0] sm:$0xff]
    %v296 = vld [vmem:[#allocation5 + $0x5f8] sm:$0xff]
    %v297 = vld [vmem:[#allocation5 + $0x600] sm:$0xff]
    %v298 = vld [vmem:[#allocation5 + $0x608] sm:$0xff]
    %v299 = vld [vmem:[#allocation5 + $0x610] sm:$0xff]
    %v300 = vld [vmem:[#allocation5 + $0x618] sm:$0xff]
    %v301 = vld [vmem:[#allocation5 + $0x620] sm:$0xff]
    %v302 = vld [vmem:[#allocation5 + $0x628] sm:$0xff]
    %v303 = vld [vmem:[#allocation5 + $0x630] sm:$0xff]
    %v304 = vld [vmem:[#allocation5 + $0x638] sm:$0xff]
    %v305 = vld [vmem:[#allocation5 + $0x640] sm:$0xff]
    %v306 = vld [vmem:[#allocation5 + $0x648] sm:$0xff]
    %v307 = vld [vmem:[#allocation5 + $0x650] sm:$0xff]
    %v308 = vld [vmem:[#allocation5 + $0x658] sm:$0xff]
    %v309 = vld [vmem:[#allocation5 + $0x660] sm:$0xff]
    %v310 = vld [vmem:[#allocation5 + $0x668] sm:$0xff]
    %v311 = vld [vmem:[#allocation5 + $0x670] sm:$0xff]
    %v312 = vld [vmem:[#allocation5 + $0x678] sm:$0xff]
    %v313 = vld [vmem:[#allocation5 + $0x680] sm:$0xff]
    %v314 = vld [vmem:[#allocation5 + $0x688] sm:$0xff]
    %v315 = vld [vmem:[#allocation5 + $0x690] sm:$0xff]
    %v316 = vld [vmem:[#allocation5 + $0x698] sm:$0xff]
    %v317 = vld [vmem:[#allocation5 + $0x6a0] sm:$0xff]
    %v318 = vld [vmem:[#allocation5 + $0x6a8] sm:$0xff]
    %v319 = vld [vmem:[#allocation5 + $0x6b0] sm:$0xff]
    %v320 = vld [vmem:[#allocation5 + $0x6b8] sm:$0xff]
    %v321 = vld [vmem:[#allocation5 + $0x6c0] sm:$0xff]
    %v322 = vld [vmem:[#allocation5 + $0x6c8] sm:$0xff]
    %v323 = vld [vmem:[#allocation5 + $0x6d0] sm:$0xff]
    %v324 = vld [vmem:[#allocation5 + $0x6d8] sm:$0xff]
    %v325 = vld [vmem:[#allocation5 + $0x6e0] sm:$0xff]
    %v326 = vld [vmem:[#allocation5 + $0x6e8] sm:$0xff]
    %v327 = vld [vmem:[#allocation5 + $0x6f0] sm:$0xff]
    %v328 = vld [vmem:[#allocation5 + $0x6f8] sm:$0xff]
    %v329 = vld [vmem:[#allocation5 + $0x700] sm:$0xff]
    %v330 = vld [vmem:[#allocation5 + $0x708] sm:$0xff]
    %v331 = vld [vmem:[#allocation5 + $0x710] sm:$0xff]
    %v332 = vld [vmem:[#allocation5 + $0x718] sm:$0xff]
    %v333 = vld [vmem:[#allocation5 + $0x720] sm:$0xff]
    %v334 = vld [vmem:[#allocation5 + $0x728] sm:$0xff]
    %v335 = vld [vmem:[#allocation5 + $0x730] sm:$0xff]
    %v336 = vld [vmem:[#allocation5 + $0x738] sm:$0xff]
    %v337 = vld [vmem:[#allocation5 + $0x740] sm:$0xff]
    %v338 = vld [vmem:[#allocation5 + $0x748] sm:$0xff]
    %v339 = vld [vmem:[#allocation5 + $0x750] sm:$0xff]
    %v340 = vld [vmem:[#allocation5 + $0x758] sm:$0xff]
    %v341 = vld [vmem:[#allocation5 + $0x760] sm:$0xff]
    %v342 = vld [vmem:[#allocation5 + $0x768] sm:$0xff]
    %v343 = vld [vmem:[#allocation5 + $0x770] sm:$0xff]
    %v344 = vld [vmem:[#allocation5 + $0x778] sm:$0xff]
    %v345 = vld [vmem:[#allocation5 + $0x780] sm:$0xff]
    %v346 = vld [vmem:[#allocation5 + $0x788] sm:$0xff]
    %v347 = vld [vmem:[#allocation5 + $0x790] sm:$0xff]
    %v348 = vld [vmem:[#allocation5 + $0x798] sm:$0xff]
    %v349 = vld [vmem:[#allocation5 + $0x7a0] sm:$0xff]
    %v350 = vld [vmem:[#allocation5 + $0x7a8] sm:$0xff]
    %v351 = vld [vmem:[#allocation5 + $0x7b0] sm:$0xff]
    %v352 = vld [vmem:[#allocation5 + $0x7b8] sm:$0xff]
    %v353 = vld [vmem:[#allocation5 + $0x7c0] sm:$0xff]
    %v354 = vld [vmem:[#allocation5 + $0x7c8] sm:$0xff]
    %v355 = vld [vmem:[#allocation5 + $0x7d0] sm:$0xff]
    %v356 = vld [vmem:[#allocation5 + $0x7d8] sm:$0xff]
    %v357 = vld [vmem:[#allocation5 + $0x7e0] sm:$0xff]
    %v358 = vld [vmem:[#allocation5 + $0x7e8] sm:$0xff]
    %v359 = vld [vmem:[#allocation5 + $0x7f0] sm:$0xff]
    %v360 = vld [vmem:[#allocation5 + $0x7f8] sm:$0xff]
    %v361 = vld [vmem:[#allocation5 + $0x800] sm:$0xff]
    %v362 = vld [vmem:[#allocation5 + $0x808] sm:$0xff]
    %v363 = vld [vmem:[#allocation5 + $0x810] sm:$0xff]
    %v364 = vld [vmem:[#allocation5 + $0x818] sm:$0xff]
    %v365 = vld [vmem:[#allocation5 + $0x820] sm:$0xff]
    %v366 = vld [vmem:[#allocation5 + $0x828] sm:$0xff]
    %v367 = vld [vmem:[#allocation5 + $0x830] sm:$0xff]
    %v368 = vld [vmem:[#allocation5 + $0x838] sm:$0xff]
    %v369 = vld [vmem:[#allocation5 + $0x840] sm:$0xff]
    %v370 = vld [vmem:[#allocation5 + $0x848] sm:$0xff]
    %v371 = vld [vmem:[#allocation5 + $0x850] sm:$0xff]
    %v372 = vld [vmem:[#allocation5 + $0x858] sm:$0xff]
    %v373 = vld [vmem:[#allocation5 + $0x860] sm:$0xff]
    %v374 = vld [vmem:[#allocation5 + $0x868] sm:$0xff]
    %v375 = vld [vmem:[#allocation5 + $0x870] sm:$0xff]
    %v376 = vld [vmem:[#allocation5 + $0x878] sm:$0xff]
    %v377 = vld [vmem:[#allocation5 + $0x880] sm:$0xff]
    %v378 = vld [vmem:[#allocation5 + $0x888] sm:$0xff]
    %v379 = vld [vmem:[#allocation5 + $0x890] sm:$0xff]
    %v380 = vld [vmem:[#allocation5 + $0x898] sm:$0xff]
    %v381 = vld [vmem:[#allocation5 + $0x8a0] sm:$0xff]
    %v382 = vld [vmem:[#allocation5 + $0x8a8] sm:$0xff]
    %v383 = vld [vmem:[#allocation5 + $0x8b0] sm:$0xff]
    %v384 = vld [vmem:[#allocation5 + $0x8b8] sm:$0xff]
    %v385 = vld [vmem:[#allocation5 + $0x8c0] sm:$0xff]
    %v386 = vld [vmem:[#allocation5 + $0x8c8] sm:$0xff]
    %v387 = vld [vmem:[#allocation5 + $0x8d0] sm:$0xff]
    %v388 = vld [vmem:[#allocation5 + $0x8d8] sm:$0xff]
    %v389 = vld [vmem:[#allocation5 + $0x8e0] sm:$0xff]
    %v390 = vld [vmem:[#allocation5 + $0x8e8] sm:$0xff]
    %v391 = vld [vmem:[#allocation5 + $0x8f0] sm:$0xff]
    %v392 = vld [vmem:[#allocation5 + $0x8f8] sm:$0xff]
    %v393 = vld [vmem:[#allocation7] sm:$0x3f]
    %v395 = vperm.slane %v393, 0
    %v396 = vperm.slane %v393, 1
    %v397 = vperm.slane %v393, 2
    %v398 = vperm.slane %v393, 3
    %v399 = vperm.slane %v393, 4
    %v400 = vperm.slane %v393, 5
    %v695 = vunpack.c.l.b16 %v105
    %v696 = vunpack.c.h.b16 %v105
    %v697 = vunpack.c.l.b16 %v106
    %v698 = vunpack.c.h.b16 %v106
    %v699 = vunpack.c.l.b16 %v107
    %v700 = vunpack.c.h.b16 %v107
    %v701 = vunpack.c.l.b16 %v108
    %v702 = vunpack.c.h.b16 %v108
    %v703 = vunpack.c.l.b16 %v109
    %v704 = vunpack.c.h.b16 %v109
    %v705 = vunpack.c.l.b16 %v110
    %v706 = vunpack.c.h.b16 %v110
    %v707 = vunpack.c.l.b16 %v111
    %v708 = vunpack.c.h.b16 %v111
    %v709 = vunpack.c.l.b16 %v112
    %v710 = vunpack.c.h.b16 %v112
    %v711 = vunpack.c.l.b16 %v113
    %v712 = vunpack.c.h.b16 %v113
    %v713 = vunpack.c.l.b16 %v114
    %v714 = vunpack.c.h.b16 %v114
    %v715 = vunpack.c.l.b16 %v115
    %v716 = vunpack.c.h.b16 %v115
    %v717 = vunpack.c.l.b16 %v116
    %v718 = vunpack.c.h.b16 %v116
    %v719 = vunpack.c.l.b16 %v117
    %v720 = vunpack.c.h.b16 %v117
    %v721 = vunpack.c.l.b16 %v118
    %v722 = vunpack.c.h.b16 %v118
    %v723 = vunpack.c.l.b16 %v119
    %v724 = vunpack.c.h.b16 %v119
    %v725 = vunpack.c.l.b16 %v120
    %v726 = vunpack.c.h.b16 %v120
    %v727 = vunpack.c.l.b16 %v121
    %v728 = vunpack.c.h.b16 %v121
    %v729 = vunpack.c.l.b16 %v122
    %v730 = vunpack.c.h.b16 %v122
    %v731 = vunpack.c.l.b16 %v123
    %v732 = vunpack.c.h.b16 %v123
    %v733 = vunpack.c.l.b16 %v124
    %v734 = vunpack.c.h.b16 %v124
    %v735 = vunpack.c.l.b16 %v125
    %v736 = vunpack.c.h.b16 %v125
    %v737 = vunpack.c.l.b16 %v126
    %v738 = vunpack.c.h.b16 %v126
    %v739 = vunpack.c.l.b16 %v127
    %v740 = vunpack.c.h.b16 %v127
    %v741 = vunpack.c.l.b16 %v128
    %v742 = vunpack.c.h.b16 %v128
    %v743 = vunpack.c.l.b16 %v129
    %v744 = vunpack.c.h.b16 %v129
    %v745 = vunpack.c.l.b16 %v130
    %v746 = vunpack.c.h.b16 %v130
    %v747 = vunpack.c.l.b16 %v131
    %v748 = vunpack.c.h.b16 %v131
    %v749 = vunpack.c.l.b16 %v132
    %v750 = vunpack.c.h.b16 %v132
    %v751 = vunpack.c.l.b16 %v133
    %v752 = vunpack.c.h.b16 %v133
    %v753 = vunpack.c.l.b16 %v134
    %v754 = vunpack.c.h.b16 %v134
    %v755 = vunpack.c.l.b16 %v135
    %v756 = vunpack.c.h.b16 %v135
    %v757 = vunpack.c.l.b16 %v136
    %v758 = vunpack.c.h.b16 %v136
    %v759 = vunpack.c.l.b16 %v137
    %v760 = vunpack.c.h.b16 %v137
    %v761 = vunpack.c.l.b16 %v138
    %v762 = vunpack.c.h.b16 %v138
    %v763 = vunpack.c.l.b16 %v139
    %v764 = vunpack.c.h.b16 %v139
    %v765 = vunpack.c.l.b16 %v140
    %v766 = vunpack.c.h.b16 %v140
    %v767 = vunpack.c.l.b16 %v141
    %v768 = vunpack.c.h.b16 %v141
    %v769 = vunpack.c.l.b16 %v142
    %v770 = vunpack.c.h.b16 %v142
    %v771 = vunpack.c.l.b16 %v143
    %v772 = vunpack.c.h.b16 %v143
    %v773 = vunpack.c.l.b16 %v144
    %v774 = vunpack.c.h.b16 %v144
    %v775 = vunpack.c.l.b16 %v145
    %v776 = vunpack.c.h.b16 %v145
    %v777 = vunpack.c.l.b16 %v146
    %v778 = vunpack.c.h.b16 %v146
    %v779 = vunpack.c.l.b16 %v147
    %v780 = vunpack.c.h.b16 %v147
    %v781 = vunpack.c.l.b16 %v148
    %v782 = vunpack.c.h.b16 %v148
    %v783 = vunpack.c.l.b16 %v149
    %v784 = vunpack.c.h.b16 %v149
    %v785 = vunpack.c.l.b16 %v150
    %v786 = vunpack.c.h.b16 %v150
    %v787 = vunpack.c.l.b16 %v151
    %v788 = vunpack.c.h.b16 %v151
    %v789 = vunpack.c.l.b16 %v152
    %v790 = vunpack.c.h.b16 %v152
    %v791 = vunpack.c.l.b16 %v153
    %v792 = vunpack.c.h.b16 %v153
    %v793 = vunpack.c.l.b16 %v154
    %v794 = vunpack.c.h.b16 %v154
    %v795 = vunpack.c.l.b16 %v155
    %v796 = vunpack.c.h.b16 %v155
    %v797 = vunpack.c.l.b16 %v156
    %v798 = vunpack.c.h.b16 %v156
    %v799 = vunpack.c.l.b16 %v157
    %v800 = vunpack.c.h.b16 %v157
    %v801 = vunpack.c.l.b16 %v158
    %v802 = vunpack.c.h.b16 %v158
    %v803 = vunpack.c.l.b16 %v159
    %v804 = vunpack.c.h.b16 %v159
    %v805 = vunpack.c.l.b16 %v160
    %v806 = vunpack.c.h.b16 %v160
    %v807 = vunpack.c.l.b16 %v161
    %v808 = vunpack.c.h.b16 %v161
    %v809 = vunpack.c.l.b16 %v162
    %v810 = vunpack.c.h.b16 %v162
    %v811 = vunpack.c.l.b16 %v163
    %v812 = vunpack.c.h.b16 %v163
    %v813 = vunpack.c.l.b16 %v164
    %v814 = vunpack.c.h.b16 %v164
    %v815 = vunpack.c.l.b16 %v165
    %v816 = vunpack.c.h.b16 %v165
    %v817 = vunpack.c.l.b16 %v166
    %v818 = vunpack.c.h.b16 %v166
    %v819 = vunpack.c.l.b16 %v167
    %v820 = vunpack.c.h.b16 %v167
    %v821 = vunpack.c.l.b16 %v168
    %v822 = vunpack.c.h.b16 %v168
    %v823 = vunpack.c.l.b16 %v169
    %v824 = vunpack.c.h.b16 %v169
    %v825 = vunpack.c.l.b16 %v170
    %v826 = vunpack.c.h.b16 %v170
    %v827 = vunpack.c.l.b16 %v171
    %v828 = vunpack.c.h.b16 %v171
    %v829 = vunpack.c.l.b16 %v172
    %v830 = vunpack.c.h.b16 %v172
    %v831 = vunpack.c.l.b16 %v173
    %v832 = vunpack.c.h.b16 %v173
    %v833 = vunpack.c.l.b16 %v174
    %v834 = vunpack.c.h.b16 %v174
    %v835 = vunpack.c.l.b16 %v175
    %v836 = vunpack.c.h.b16 %v175
    %v837 = vunpack.c.l.b16 %v176
    %v838 = vunpack.c.h.b16 %v176
    %v839 = vunpack.c.l.b16 %v177
    %v840 = vunpack.c.h.b16 %v177
    %v841 = vunpack.c.l.b16 %v178
    %v842 = vunpack.c.h.b16 %v178
    %v843 = vunpack.c.l.b16 %v179
    %v844 = vunpack.c.h.b16 %v179
    %v845 = vunpack.c.l.b16 %v180
    %v846 = vunpack.c.h.b16 %v180
    %v847 = vunpack.c.l.b16 %v181
    %v848 = vunpack.c.h.b16 %v181
    %v849 = vunpack.c.l.b16 %v182
    %v850 = vunpack.c.h.b16 %v182
    %v851 = vunpack.c.l.b16 %v183
    %v852 = vunpack.c.h.b16 %v183
    %v853 = vunpack.c.l.b16 %v184
    %v854 = vunpack.c.h.b16 %v184
    %v855 = vunpack.c.l.b16 %v185
    %v856 = vunpack.c.h.b16 %v185
    %v857 = vunpack.c.l.b16 %v186
    %v858 = vunpack.c.h.b16 %v186
    %v859 = vunpack.c.l.b16 %v187
    %v860 = vunpack.c.h.b16 %v187
    %v861 = vunpack.c.l.b16 %v188
    %v862 = vunpack.c.h.b16 %v188
    %v863 = vunpack.c.l.b16 %v189
    %v864 = vunpack.c.h.b16 %v189
    %v865 = vunpack.c.l.b16 %v190
    %v866 = vunpack.c.h.b16 %v190
    %v867 = vunpack.c.l.b16 %v191
    %v868 = vunpack.c.h.b16 %v191
    %v869 = vunpack.c.l.b16 %v192
    %v870 = vunpack.c.h.b16 %v192
    %v871 = vunpack.c.l.b16 %v193
    %v872 = vunpack.c.h.b16 %v193
    %v873 = vunpack.c.l.b16 %v194
    %v874 = vunpack.c.h.b16 %v194
    %v875 = vunpack.c.l.b16 %v195
    %v876 = vunpack.c.h.b16 %v195
    %v877 = vunpack.c.l.b16 %v196
    %v878 = vunpack.c.h.b16 %v196
    %v879 = vunpack.c.l.b16 %v197
    %v880 = vunpack.c.h.b16 %v197
    %v881 = vunpack.c.l.b16 %v198
    %v882 = vunpack.c.h.b16 %v198
    %v883 = vunpack.c.l.b16 %v199
    %v884 = vunpack.c.h.b16 %v199
    %v885 = vunpack.c.l.b16 %v200
    %v886 = vunpack.c.h.b16 %v200
    %v887 = vunpack.c.l.b16 %v201
    %v888 = vunpack.c.h.b16 %v201
    %v889 = vunpack.c.l.b16 %v202
    %v890 = vunpack.c.h.b16 %v202
    %v891 = vunpack.c.l.b16 %v203
    %v892 = vunpack.c.h.b16 %v203
    %v893 = vunpack.c.l.b16 %v204
    %v894 = vunpack.c.h.b16 %v204
    %v895 = vunpack.c.l.b16 %v205
    %v896 = vunpack.c.h.b16 %v205
    %v897 = vunpack.c.l.b16 %v206
    %v898 = vunpack.c.h.b16 %v206
    %v899 = vunpack.c.l.b16 %v207
    %v900 = vunpack.c.h.b16 %v207
    %v901 = vunpack.c.l.b16 %v208
    %v902 = vunpack.c.h.b16 %v208
    %v903 = vunpack.c.l.b16 %v209
    %v904 = vunpack.c.h.b16 %v209
    %v905 = vunpack.c.l.b16 %v210
    %v906 = vunpack.c.h.b16 %v210
    %v907 = vunpack.c.l.b16 %v211
    %v908 = vunpack.c.h.b16 %v211
    %v909 = vunpack.c.l.b16 %v212
    %v910 = vunpack.c.h.b16 %v212
    %v911 = vunpack.c.l.b16 %v213
    %v912 = vunpack.c.h.b16 %v213
    %v913 = vunpack.c.l.b16 %v214
    %v914 = vunpack.c.h.b16 %v214
    %v915 = vunpack.c.l.b16 %v215
    %v916 = vunpack.c.h.b16 %v215
    %v917 = vunpack.c.l.b16 %v216
    %v918 = vunpack.c.h.b16 %v216
    %v919 = vunpack.c.l.b16 %v217
    %v920 = vunpack.c.h.b16 %v217
    %v921 = vunpack.c.l.b16 %v218
    %v922 = vunpack.c.h.b16 %v218
    %v923 = vunpack.c.l.b16 %v219
    %v924 = vunpack.c.h.b16 %v219
    %v925 = vunpack.c.l.b16 %v220
    %v926 = vunpack.c.h.b16 %v220
    %v927 = vunpack.c.l.b16 %v221
    %v928 = vunpack.c.h.b16 %v221
    %v929 = vunpack.c.l.b16 %v222
    %v930 = vunpack.c.h.b16 %v222
    %v931 = vunpack.c.l.b16 %v223
    %v932 = vunpack.c.h.b16 %v223
    %v933 = vunpack.c.l.b16 %v224
    %v934 = vunpack.c.h.b16 %v224
    %v935 = vunpack.c.l.b16 %v225
    %v936 = vunpack.c.h.b16 %v225
    %v937 = vunpack.c.l.b16 %v226
    %v938 = vunpack.c.h.b16 %v226
    %v939 = vunpack.c.l.b16 %v227
    %v940 = vunpack.c.h.b16 %v227
    %v941 = vunpack.c.l.b16 %v228
    %v942 = vunpack.c.h.b16 %v228
    %v943 = vunpack.c.l.b16 %v229
    %v944 = vunpack.c.h.b16 %v229
    %v945 = vunpack.c.l.b16 %v230
    %v946 = vunpack.c.h.b16 %v230
    %v947 = vunpack.c.l.b16 %v231
    %v948 = vunpack.c.h.b16 %v231
    %v949 = vunpack.c.l.b16 %v232
    %v950 = vunpack.c.h.b16 %v232
    %v951 = vunpack.c.l.b16 %v233
    %v952 = vunpack.c.h.b16 %v233
    %v953 = vunpack.c.l.b16 %v234
    %v954 = vunpack.c.h.b16 %v234
    %v955 = vunpack.c.l.b16 %v235
    %v956 = vunpack.c.h.b16 %v235
    %v957 = vunpack.c.l.b16 %v236
    %v958 = vunpack.c.h.b16 %v236
    %v959 = vunpack.c.l.b16 %v237
    %v960 = vunpack.c.h.b16 %v237
    %v961 = vunpack.c.l.b16 %v238
    %v962 = vunpack.c.h.b16 %v238
    %v963 = vunpack.c.l.b16 %v239
    %v964 = vunpack.c.h.b16 %v239
    %v965 = vunpack.c.l.b16 %v240
    %v966 = vunpack.c.h.b16 %v240
    %v967 = vunpack.c.l.b16 %v241
    %v968 = vunpack.c.h.b16 %v241
    %v969 = vunpack.c.l.b16 %v242
    %v970 = vunpack.c.h.b16 %v242
    %v971 = vunpack.c.l.b16 %v243
    %v972 = vunpack.c.h.b16 %v243
    %v973 = vunpack.c.l.b16 %v244
    %v974 = vunpack.c.h.b16 %v244
    %v975 = vunpack.c.l.b16 %v245
    %v976 = vunpack.c.h.b16 %v245
    %v977 = vunpack.c.l.b16 %v246
    %v978 = vunpack.c.h.b16 %v246
    %v979 = vunpack.c.l.b16 %v247
    %v980 = vunpack.c.h.b16 %v247
    %v981 = vunpack.c.l.b16 %v248
    %v982 = vunpack.c.h.b16 %v248
    %v983 = vunpack.c.l.b16 %v249
    %v984 = vunpack.c.h.b16 %v249
    %v985 = vunpack.c.l.b16 %v250
    %v986 = vunpack.c.h.b16 %v250
    %v987 = vunpack.c.l.b16 %v251
    %v988 = vunpack.c.h.b16 %v251
    %v989 = vunpack.c.l.b16 %v252
    %v990 = vunpack.c.h.b16 %v252
    %v991 = vunpack.c.l.b16 %v253
    %v992 = vunpack.c.h.b16 %v253
    %v993 = vunpack.c.l.b16 %v254
    %v994 = vunpack.c.h.b16 %v254
    %v995 = vunpack.c.l.b16 %v255
    %v996 = vunpack.c.h.b16 %v255
    %v997 = vunpack.c.l.b16 %v256
    %v998 = vunpack.c.h.b16 %v256
    %v999 = vunpack.c.l.b16 %v257
    %v1000 = vunpack.c.h.b16 %v257
    %v1001 = vunpack.c.l.b16 %v258
    %v1002 = vunpack.c.h.b16 %v258
    %v1003 = vunpack.c.l.b16 %v259
    %v1004 = vunpack.c.h.b16 %v259
    %v1005 = vunpack.c.l.b16 %v260
    %v1006 = vunpack.c.h.b16 %v260
    %v1007 = vunpack.c.l.b16 %v261
    %v1008 = vunpack.c.h.b16 %v261
    %v1009 = vunpack.c.l.b16 %v262
    %v1010 = vunpack.c.h.b16 %v262
    %v1011 = vunpack.c.l.b16 %v263
    %v1012 = vunpack.c.h.b16 %v263
    %v1013 = vunpack.c.l.b16 %v264
    %v1014 = vunpack.c.h.b16 %v264
    %v1015 = vunpack.c.l.b16 %v265
    %v1016 = vunpack.c.h.b16 %v265
    %v1017 = vunpack.c.l.b16 %v266
    %v1018 = vunpack.c.h.b16 %v266
    %v1019 = vunpack.c.l.b16 %v267
    %v1020 = vunpack.c.h.b16 %v267
    %v1021 = vunpack.c.l.b16 %v268
    %v1022 = vunpack.c.h.b16 %v268
    %v1023 = vunpack.c.l.b16 %v269
    %v1024 = vunpack.c.h.b16 %v269
    %v1025 = vunpack.c.l.b16 %v270
    %v1026 = vunpack.c.h.b16 %v270
    %v1027 = vunpack.c.l.b16 %v271
    %v1028 = vunpack.c.h.b16 %v271
    %v1029 = vunpack.c.l.b16 %v272
    %v1030 = vunpack.c.h.b16 %v272
    %v1031 = vunpack.c.l.b16 %v273
    %v1032 = vunpack.c.h.b16 %v273
    %v1033 = vunpack.c.l.b16 %v274
    %v1034 = vunpack.c.h.b16 %v274
    %v1035 = vunpack.c.l.b16 %v275
    %v1036 = vunpack.c.h.b16 %v275
    %v1037 = vunpack.c.l.b16 %v276
    %v1038 = vunpack.c.h.b16 %v276
    %v1039 = vunpack.c.l.b16 %v277
    %v1040 = vunpack.c.h.b16 %v277
    %v1041 = vunpack.c.l.b16 %v278
    %v1042 = vunpack.c.h.b16 %v278
    %v1043 = vunpack.c.l.b16 %v279
    %v1044 = vunpack.c.h.b16 %v279
    %v1045 = vunpack.c.l.b16 %v280
    %v1046 = vunpack.c.h.b16 %v280
    %v1047 = vunpack.c.l.b16 %v281
    %v1048 = vunpack.c.h.b16 %v281
    %v1049 = vunpack.c.l.b16 %v282
    %v1050 = vunpack.c.h.b16 %v282
    %v1051 = vunpack.c.l.b16 %v283
    %v1052 = vunpack.c.h.b16 %v283
    %v1053 = vunpack.c.l.b16 %v284
    %v1054 = vunpack.c.h.b16 %v284
    %v1055 = vunpack.c.l.b16 %v285
    %v1056 = vunpack.c.h.b16 %v285
    %v1057 = vunpack.c.l.b16 %v286
    %v1058 = vunpack.c.h.b16 %v286
    %v1059 = vunpack.c.l.b16 %v287
    %v1060 = vunpack.c.h.b16 %v287
    %v1061 = vunpack.c.l.b16 %v288
    %v1062 = vunpack.c.h.b16 %v288
    %v1063 = vunpack.c.l.b16 %v289
    %v1064 = vunpack.c.h.b16 %v289
    %v1065 = vunpack.c.l.b16 %v290
    %v1066 = vunpack.c.h.b16 %v290
    %v1067 = vunpack.c.l.b16 %v291
    %v1068 = vunpack.c.h.b16 %v291
    %v1069 = vunpack.c.l.b16 %v292
    %v1070 = vunpack.c.h.b16 %v292
    %v1071 = vunpack.c.l.b16 %v293
    %v1072 = vunpack.c.h.b16 %v293
    %v1073 = vunpack.c.l.b16 %v294
    %v1074 = vunpack.c.h.b16 %v294
    %v1075 = vunpack.c.l.b16 %v295
    %v1076 = vunpack.c.h.b16 %v295
    %v1077 = vunpack.c.l.b16 %v296
    %v1078 = vunpack.c.h.b16 %v296
    %v1079 = vunpack.c.l.b16 %v297
    %v1080 = vunpack.c.h.b16 %v297
    %v1081 = vunpack.c.l.b16 %v298
    %v1082 = vunpack.c.h.b16 %v298
    %v1083 = vunpack.c.l.b16 %v299
    %v1084 = vunpack.c.h.b16 %v299
    %v1085 = vunpack.c.l.b16 %v300
    %v1086 = vunpack.c.h.b16 %v300
    %v1087 = vunpack.c.l.b16 %v301
    %v1088 = vunpack.c.h.b16 %v301
    %v1089 = vunpack.c.l.b16 %v302
    %v1090 = vunpack.c.h.b16 %v302
    %v1091 = vunpack.c.l.b16 %v303
    %v1092 = vunpack.c.h.b16 %v303
    %v1093 = vunpack.c.l.b16 %v304
    %v1094 = vunpack.c.h.b16 %v304
    %v1095 = vunpack.c.l.b16 %v305
    %v1096 = vunpack.c.h.b16 %v305
    %v1097 = vunpack.c.l.b16 %v306
    %v1098 = vunpack.c.h.b16 %v306
    %v1099 = vunpack.c.l.b16 %v307
    %v1100 = vunpack.c.h.b16 %v307
    %v1101 = vunpack.c.l.b16 %v308
    %v1102 = vunpack.c.h.b16 %v308
    %v1103 = vunpack.c.l.b16 %v309
    %v1104 = vunpack.c.h.b16 %v309
    %v1105 = vunpack.c.l.b16 %v310
    %v1106 = vunpack.c.h.b16 %v310
    %v1107 = vunpack.c.l.b16 %v311
    %v1108 = vunpack.c.h.b16 %v311
    %v1109 = vunpack.c.l.b16 %v312
    %v1110 = vunpack.c.h.b16 %v312
    %v1111 = vunpack.c.l.b16 %v313
    %v1112 = vunpack.c.h.b16 %v313
    %v1113 = vunpack.c.l.b16 %v314
    %v1114 = vunpack.c.h.b16 %v314
    %v1115 = vunpack.c.l.b16 %v315
    %v1116 = vunpack.c.h.b16 %v315
    %v1117 = vunpack.c.l.b16 %v316
    %v1118 = vunpack.c.h.b16 %v316
    %v1119 = vunpack.c.l.b16 %v317
    %v1120 = vunpack.c.h.b16 %v317
    %v1121 = vunpack.c.l.b16 %v318
    %v1122 = vunpack.c.h.b16 %v318
    %v1123 = vunpack.c.l.b16 %v319
    %v1124 = vunpack.c.h.b16 %v319
    %v1125 = vunpack.c.l.b16 %v320
    %v1126 = vunpack.c.h.b16 %v320
    %v1127 = vunpack.c.l.b16 %v321
    %v1128 = vunpack.c.h.b16 %v321
    %v1129 = vunpack.c.l.b16 %v322
    %v1130 = vunpack.c.h.b16 %v322
    %v1131 = vunpack.c.l.b16 %v323
    %v1132 = vunpack.c.h.b16 %v323
    %v1133 = vunpack.c.l.b16 %v324
    %v1134 = vunpack.c.h.b16 %v324
    %v1135 = vunpack.c.l.b16 %v325
    %v1136 = vunpack.c.h.b16 %v325
    %v1137 = vunpack.c.l.b16 %v326
    %v1138 = vunpack.c.h.b16 %v326
    %v1139 = vunpack.c.l.b16 %v327
    %v1140 = vunpack.c.h.b16 %v327
    %v1141 = vunpack.c.l.b16 %v328
    %v1142 = vunpack.c.h.b16 %v328
    %v1143 = vunpack.c.l.b16 %v329
    %v1144 = vunpack.c.h.b16 %v329
    %v1145 = vunpack.c.l.b16 %v330
    %v1146 = vunpack.c.h.b16 %v330
    %v1147 = vunpack.c.l.b16 %v331
    %v1148 = vunpack.c.h.b16 %v331
    %v1149 = vunpack.c.l.b16 %v332
    %v1150 = vunpack.c.h.b16 %v332
    %v1151 = vunpack.c.l.b16 %v333
    %v1152 = vunpack.c.h.b16 %v333
    %v1153 = vunpack.c.l.b16 %v334
    %v1154 = vunpack.c.h.b16 %v334
    %v1155 = vunpack.c.l.b16 %v335
    %v1156 = vunpack.c.h.b16 %v335
    %v1157 = vunpack.c.l.b16 %v336
    %v1158 = vunpack.c.h.b16 %v336
    %v1159 = vunpack.c.l.b16 %v337
    %v1160 = vunpack.c.h.b16 %v337
    %v1161 = vunpack.c.l.b16 %v338
    %v1162 = vunpack.c.h.b16 %v338
    %v1163 = vunpack.c.l.b16 %v339
    %v1164 = vunpack.c.h.b16 %v339
    %v1165 = vunpack.c.l.b16 %v340
    %v1166 = vunpack.c.h.b16 %v340
    %v1167 = vunpack.c.l.b16 %v341
    %v1168 = vunpack.c.h.b16 %v341
    %v1169 = vunpack.c.l.b16 %v342
    %v1170 = vunpack.c.h.b16 %v342
    %v1171 = vunpack.c.l.b16 %v343
    %v1172 = vunpack.c.h.b16 %v343
    %v1173 = vunpack.c.l.b16 %v344
    %v1174 = vunpack.c.h.b16 %v344
    %v1175 = vunpack.c.l.b16 %v345
    %v1176 = vunpack.c.h.b16 %v345
    %v1177 = vunpack.c.l.b16 %v346
    %v1178 = vunpack.c.h.b16 %v346
    %v1179 = vunpack.c.l.b16 %v347
    %v1180 = vunpack.c.h.b16 %v347
    %v1181 = vunpack.c.l.b16 %v348
    %v1182 = vunpack.c.h.b16 %v348
    %v1183 = vunpack.c.l.b16 %v349
    %v1184 = vunpack.c.h.b16 %v349
    %v1185 = vunpack.c.l.b16 %v350
    %v1186 = vunpack.c.h.b16 %v350
    %v1187 = vunpack.c.l.b16 %v351
    %v1188 = vunpack.c.h.b16 %v351
    %v1189 = vunpack.c.l.b16 %v352
    %v1190 = vunpack.c.h.b16 %v352
    %v1191 = vunpack.c.l.b16 %v353
    %v1192 = vunpack.c.h.b16 %v353
    %v1193 = vunpack.c.l.b16 %v354
    %v1194 = vunpack.c.h.b16 %v354
    %v1195 = vunpack.c.l.b16 %v355
    %v1196 = vunpack.c.h.b16 %v355
    %v1197 = vunpack.c.l.b16 %v356
    %v1198 = vunpack.c.h.b16 %v356
    %v1199 = vunpack.c.l.b16 %v357
    %v1200 = vunpack.c.h.b16 %v357
    %v1201 = vunpack.c.l.b16 %v358
    %v1202 = vunpack.c.h.b16 %v358
    %v1203 = vunpack.c.l.b16 %v359
    %v1204 = vunpack.c.h.b16 %v359
    %v1205 = vunpack.c.l.b16 %v360
    %v1206 = vunpack.c.h.b16 %v360
    %v1207 = vunpack.c.l.b16 %v361
    %v1208 = vunpack.c.h.b16 %v361
    %v1209 = vunpack.c.l.b16 %v362
    %v1210 = vunpack.c.h.b16 %v362
    %v1211 = vunpack.c.l.b16 %v363
    %v1212 = vunpack.c.h.b16 %v363
    %v1213 = vunpack.c.l.b16 %v364
    %v1214 = vunpack.c.h.b16 %v364
    %v1215 = vunpack.c.l.b16 %v365
    %v1216 = vunpack.c.h.b16 %v365
    %v1217 = vunpack.c.l.b16 %v366
    %v1218 = vunpack.c.h.b16 %v366
    %v1219 = vunpack.c.l.b16 %v367
    %v1220 = vunpack.c.h.b16 %v367
    %v1221 = vunpack.c.l.b16 %v368
    %v1222 = vunpack.c.h.b16 %v368
    %v1223 = vunpack.c.l.b16 %v369
    %v1224 = vunpack.c.h.b16 %v369
    %v1225 = vunpack.c.l.b16 %v370
    %v1226 = vunpack.c.h.b16 %v370
    %v1227 = vunpack.c.l.b16 %v371
    %v1228 = vunpack.c.h.b16 %v371
    %v1229 = vunpack.c.l.b16 %v372
    %v1230 = vunpack.c.h.b16 %v372
    %v1231 = vunpack.c.l.b16 %v373
    %v1232 = vunpack.c.h.b16 %v373
    %v1233 = vunpack.c.l.b16 %v374
    %v1234 = vunpack.c.h.b16 %v374
    %v1235 = vunpack.c.l.b16 %v375
    %v1236 = vunpack.c.h.b16 %v375
    %v1237 = vunpack.c.l.b16 %v376
    %v1238 = vunpack.c.h.b16 %v376
    %v1239 = vunpack.c.l.b16 %v377
    %v1240 = vunpack.c.h.b16 %v377
    %v1241 = vunpack.c.l.b16 %v378
    %v1242 = vunpack.c.h.b16 %v378
    %v1243 = vunpack.c.l.b16 %v379
    %v1244 = vunpack.c.h.b16 %v379
    %v1245 = vunpack.c.l.b16 %v380
    %v1246 = vunpack.c.h.b16 %v380
    %v1247 = vunpack.c.l.b16 %v381
    %v1248 = vunpack.c.h.b16 %v381
    %v1249 = vunpack.c.l.b16 %v382
    %v1250 = vunpack.c.h.b16 %v382
    %v1251 = vunpack.c.l.b16 %v383
    %v1252 = vunpack.c.h.b16 %v383
    %v1253 = vunpack.c.l.b16 %v384
    %v1254 = vunpack.c.h.b16 %v384
    %v1255 = vunpack.c.l.b16 %v385
    %v1256 = vunpack.c.h.b16 %v385
    %v1257 = vunpack.c.l.b16 %v386
    %v1258 = vunpack.c.h.b16 %v386
    %v1259 = vunpack.c.l.b16 %v387
    %v1260 = vunpack.c.h.b16 %v387
    %v1261 = vunpack.c.l.b16 %v388
    %v1262 = vunpack.c.h.b16 %v388
    %v1263 = vunpack.c.l.b16 %v389
    %v1264 = vunpack.c.h.b16 %v389
    %v1265 = vunpack.c.l.b16 %v390
    %v1266 = vunpack.c.h.b16 %v390
    %v1267 = vunpack.c.l.b16 %v391
    %v1268 = vunpack.c.h.b16 %v391
    %v1269 = vunpack.c.l.b16 %v392
    %v1270 = vunpack.c.h.b16 %v392
    %v1271 = vpack.c.b16 %v701, %v695
    %v1272 = vpack.c.b16 %v702, %v696
    %v1273 = vpack.c.b16 %v703, %v697
    %v1274 = vpack.c.b16 %v704, %v698
    %v1275 = vpack.c.b16 %v705, %v699
    %v1276 = vpack.c.b16 %v706, %v700
    %v1277 = vpack.c.b16 %v713, %v707
    %v1278 = vpack.c.b16 %v714, %v708
    %v1279 = vpack.c.b16 %v715, %v709
    %v1280 = vpack.c.b16 %v716, %v710
    %v1281 = vpack.c.b16 %v717, %v711
    %v1282 = vpack.c.b16 %v718, %v712
    %v1283 = vpack.c.b16 %v725, %v719
    %v1284 = vpack.c.b16 %v726, %v720
    %v1285 = vpack.c.b16 %v727, %v721
    %v1286 = vpack.c.b16 %v728, %v722
    %v1287 = vpack.c.b16 %v729, %v723
    %v1288 = vpack.c.b16 %v730, %v724
    %v1289 = vpack.c.b16 %v737, %v731
    %v1290 = vpack.c.b16 %v738, %v732
    %v1291 = vpack.c.b16 %v739, %v733
    %v1292 = vpack.c.b16 %v740, %v734
    %v1293 = vpack.c.b16 %v741, %v735
    %v1294 = vpack.c.b16 %v742, %v736
    %v1295 = vpack.c.b16 %v749, %v743
    %v1296 = vpack.c.b16 %v750, %v744
    %v1297 = vpack.c.b16 %v751, %v745
    %v1298 = vpack.c.b16 %v752, %v746
    %v1299 = vpack.c.b16 %v753, %v747
    %v1300 = vpack.c.b16 %v754, %v748
    %v1301 = vpack.c.b16 %v761, %v755
    %v1302 = vpack.c.b16 %v762, %v756
    %v1303 = vpack.c.b16 %v763, %v757
    %v1304 = vpack.c.b16 %v764, %v758
    %v1305 = vpack.c.b16 %v765, %v759
    %v1306 = vpack.c.b16 %v766, %v760
    %v1307 = vpack.c.b16 %v773, %v767
    %v1308 = vpack.c.b16 %v774, %v768
    %v1309 = vpack.c.b16 %v775, %v769
    %v1310 = vpack.c.b16 %v776, %v770
    %v1311 = vpack.c.b16 %v777, %v771
    %v1312 = vpack.c.b16 %v778, %v772
    %v1313 = vpack.c.b16 %v785, %v779
    %v1314 = vpack.c.b16 %v786, %v780
    %v1315 = vpack.c.b16 %v787, %v781
    %v1316 = vpack.c.b16 %v788, %v782
    %v1317 = vpack.c.b16 %v789, %v783
    %v1318 = vpack.c.b16 %v790, %v784
    %v1319 = vpack.c.b16 %v797, %v791
    %v1320 = vpack.c.b16 %v798, %v792
    %v1321 = vpack.c.b16 %v799, %v793
    %v1322 = vpack.c.b16 %v800, %v794
    %v1323 = vpack.c.b16 %v801, %v795
    %v1324 = vpack.c.b16 %v802, %v796
    %v1325 = vpack.c.b16 %v809, %v803
    %v1326 = vpack.c.b16 %v810, %v804
    %v1327 = vpack.c.b16 %v811, %v805
    %v1328 = vpack.c.b16 %v812, %v806
    %v1329 = vpack.c.b16 %v813, %v807
    %v1330 = vpack.c.b16 %v814, %v808
    %v1331 = vpack.c.b16 %v821, %v815
    %v1332 = vpack.c.b16 %v822, %v816
    %v1333 = vpack.c.b16 %v823, %v817
    %v1334 = vpack.c.b16 %v824, %v818
    %v1335 = vpack.c.b16 %v825, %v819
    %v1336 = vpack.c.b16 %v826, %v820
    %v1337 = vpack.c.b16 %v833, %v827
    %v1338 = vpack.c.b16 %v834, %v828
    %v1339 = vpack.c.b16 %v835, %v829
    %v1340 = vpack.c.b16 %v836, %v830
    %v1341 = vpack.c.b16 %v837, %v831
    %v1342 = vpack.c.b16 %v838, %v832
    %v1343 = vpack.c.b16 %v845, %v839
    %v1344 = vpack.c.b16 %v846, %v840
    %v1345 = vpack.c.b16 %v847, %v841
    %v1346 = vpack.c.b16 %v848, %v842
    %v1347 = vpack.c.b16 %v849, %v843
    %v1348 = vpack.c.b16 %v850, %v844
    %v1349 = vpack.c.b16 %v857, %v851
    %v1350 = vpack.c.b16 %v858, %v852
    %v1351 = vpack.c.b16 %v859, %v853
    %v1352 = vpack.c.b16 %v860, %v854
    %v1353 = vpack.c.b16 %v861, %v855
    %v1354 = vpack.c.b16 %v862, %v856
    %v1355 = vpack.c.b16 %v869, %v863
    %v1356 = vpack.c.b16 %v870, %v864
    %v1357 = vpack.c.b16 %v871, %v865
    %v1358 = vpack.c.b16 %v872, %v866
    %v1359 = vpack.c.b16 %v873, %v867
    %v1360 = vpack.c.b16 %v874, %v868
    %v1361 = vpack.c.b16 %v881, %v875
    %v1362 = vpack.c.b16 %v882, %v876
    %v1363 = vpack.c.b16 %v883, %v877
    %v1364 = vpack.c.b16 %v884, %v878
    %v1365 = vpack.c.b16 %v885, %v879
    %v1366 = vpack.c.b16 %v886, %v880
    %v1367 = vpack.c.b16 %v893, %v887
    %v1368 = vpack.c.b16 %v894, %v888
    %v1369 = vpack.c.b16 %v895, %v889
    %v1370 = vpack.c.b16 %v896, %v890
    %v1371 = vpack.c.b16 %v897, %v891
    %v1372 = vpack.c.b16 %v898, %v892
    %v1373 = vpack.c.b16 %v905, %v899
    %v1374 = vpack.c.b16 %v906, %v900
    %v1375 = vpack.c.b16 %v907, %v901
    %v1376 = vpack.c.b16 %v908, %v902
    %v1377 = vpack.c.b16 %v909, %v903
    %v1378 = vpack.c.b16 %v910, %v904
    %v1379 = vpack.c.b16 %v917, %v911
    %v1380 = vpack.c.b16 %v918, %v912
    %v1381 = vpack.c.b16 %v919, %v913
    %v1382 = vpack.c.b16 %v920, %v914
    %v1383 = vpack.c.b16 %v921, %v915
    %v1384 = vpack.c.b16 %v922, %v916
    %v1385 = vpack.c.b16 %v929, %v923
    %v1386 = vpack.c.b16 %v930, %v924
    %v1387 = vpack.c.b16 %v931, %v925
    %v1388 = vpack.c.b16 %v932, %v926
    %v1389 = vpack.c.b16 %v933, %v927
    %v1390 = vpack.c.b16 %v934, %v928
    %v1391 = vpack.c.b16 %v941, %v935
    %v1392 = vpack.c.b16 %v942, %v936
    %v1393 = vpack.c.b16 %v943, %v937
    %v1394 = vpack.c.b16 %v944, %v938
    %v1395 = vpack.c.b16 %v945, %v939
    %v1396 = vpack.c.b16 %v946, %v940
    %v1397 = vpack.c.b16 %v953, %v947
    %v1398 = vpack.c.b16 %v954, %v948
    %v1399 = vpack.c.b16 %v955, %v949
    %v1400 = vpack.c.b16 %v956, %v950
    %v1401 = vpack.c.b16 %v957, %v951
    %v1402 = vpack.c.b16 %v958, %v952
    %v1403 = vpack.c.b16 %v965, %v959
    %v1404 = vpack.c.b16 %v966, %v960
    %v1405 = vpack.c.b16 %v967, %v961
    %v1406 = vpack.c.b16 %v968, %v962
    %v1407 = vpack.c.b16 %v969, %v963
    %v1408 = vpack.c.b16 %v970, %v964
    %v1409 = vpack.c.b16 %v977, %v971
    %v1410 = vpack.c.b16 %v978, %v972
    %v1411 = vpack.c.b16 %v979, %v973
    %v1412 = vpack.c.b16 %v980, %v974
    %v1413 = vpack.c.b16 %v981, %v975
    %v1414 = vpack.c.b16 %v982, %v976
    %v1415 = vpack.c.b16 %v989, %v983
    %v1416 = vpack.c.b16 %v990, %v984
    %v1417 = vpack.c.b16 %v991, %v985
    %v1418 = vpack.c.b16 %v992, %v986
    %v1419 = vpack.c.b16 %v993, %v987
    %v1420 = vpack.c.b16 %v994, %v988
    %v1421 = vpack.c.b16 %v1001, %v995
    %v1422 = vpack.c.b16 %v1002, %v996
    %v1423 = vpack.c.b16 %v1003, %v997
    %v1424 = vpack.c.b16 %v1004, %v998
    %v1425 = vpack.c.b16 %v1005, %v999
    %v1426 = vpack.c.b16 %v1006, %v1000
    %v1427 = vpack.c.b16 %v1013, %v1007
    %v1428 = vpack.c.b16 %v1014, %v1008
    %v1429 = vpack.c.b16 %v1015, %v1009
    %v1430 = vpack.c.b16 %v1016, %v1010
    %v1431 = vpack.c.b16 %v1017, %v1011
    %v1432 = vpack.c.b16 %v1018, %v1012
    %v1433 = vpack.c.b16 %v1025, %v1019
    %v1434 = vpack.c.b16 %v1026, %v1020
    %v1435 = vpack.c.b16 %v1027, %v1021
    %v1436 = vpack.c.b16 %v1028, %v1022
    %v1437 = vpack.c.b16 %v1029, %v1023
    %v1438 = vpack.c.b16 %v1030, %v1024
    %v1439 = vpack.c.b16 %v1037, %v1031
    %v1440 = vpack.c.b16 %v1038, %v1032
    %v1441 = vpack.c.b16 %v1039, %v1033
    %v1442 = vpack.c.b16 %v1040, %v1034
    %v1443 = vpack.c.b16 %v1041, %v1035
    %v1444 = vpack.c.b16 %v1042, %v1036
    %v1445 = vpack.c.b16 %v1049, %v1043
    %v1446 = vpack.c.b16 %v1050, %v1044
    %v1447 = vpack.c.b16 %v1051, %v1045
    %v1448 = vpack.c.b16 %v1052, %v1046
    %v1449 = vpack.c.b16 %v1053, %v1047
    %v1450 = vpack.c.b16 %v1054, %v1048
    %v1451 = vpack.c.b16 %v1061, %v1055
    %v1452 = vpack.c.b16 %v1062, %v1056
    %v1453 = vpack.c.b16 %v1063, %v1057
    %v1454 = vpack.c.b16 %v1064, %v1058
    %v1455 = vpack.c.b16 %v1065, %v1059
    %v1456 = vpack.c.b16 %v1066, %v1060
    %v1457 = vpack.c.b16 %v1073, %v1067
    %v1458 = vpack.c.b16 %v1074, %v1068
    %v1459 = vpack.c.b16 %v1075, %v1069
    %v1460 = vpack.c.b16 %v1076, %v1070
    %v1461 = vpack.c.b16 %v1077, %v1071
    %v1462 = vpack.c.b16 %v1078, %v1072
    %v1463 = vpack.c.b16 %v1085, %v1079
    %v1464 = vpack.c.b16 %v1086, %v1080
    %v1465 = vpack.c.b16 %v1087, %v1081
    %v1466 = vpack.c.b16 %v1088, %v1082
    %v1467 = vpack.c.b16 %v1089, %v1083
    %v1468 = vpack.c.b16 %v1090, %v1084
    %v1469 = vpack.c.b16 %v1097, %v1091
    %v1470 = vpack.c.b16 %v1098, %v1092
    %v1471 = vpack.c.b16 %v1099, %v1093
    %v1472 = vpack.c.b16 %v1100, %v1094
    %v1473 = vpack.c.b16 %v1101, %v1095
    %v1474 = vpack.c.b16 %v1102, %v1096
    %v1475 = vpack.c.b16 %v1109, %v1103
    %v1476 = vpack.c.b16 %v1110, %v1104
    %v1477 = vpack.c.b16 %v1111, %v1105
    %v1478 = vpack.c.b16 %v1112, %v1106
    %v1479 = vpack.c.b16 %v1113, %v1107
    %v1480 = vpack.c.b16 %v1114, %v1108
    %v1481 = vpack.c.b16 %v1121, %v1115
    %v1482 = vpack.c.b16 %v1122, %v1116
    %v1483 = vpack.c.b16 %v1123, %v1117
    %v1484 = vpack.c.b16 %v1124, %v1118
    %v1485 = vpack.c.b16 %v1125, %v1119
    %v1486 = vpack.c.b16 %v1126, %v1120
    %v1487 = vpack.c.b16 %v1133, %v1127
    %v1488 = vpack.c.b16 %v1134, %v1128
    %v1489 = vpack.c.b16 %v1135, %v1129
    %v1490 = vpack.c.b16 %v1136, %v1130
    %v1491 = vpack.c.b16 %v1137, %v1131
    %v1492 = vpack.c.b16 %v1138, %v1132
    %v1493 = vpack.c.b16 %v1145, %v1139
    %v1494 = vpack.c.b16 %v1146, %v1140
    %v1495 = vpack.c.b16 %v1147, %v1141
    %v1496 = vpack.c.b16 %v1148, %v1142
    %v1497 = vpack.c.b16 %v1149, %v1143
    %v1498 = vpack.c.b16 %v1150, %v1144
    %v1499 = vpack.c.b16 %v1157, %v1151
    %v1500 = vpack.c.b16 %v1158, %v1152
    %v1501 = vpack.c.b16 %v1159, %v1153
    %v1502 = vpack.c.b16 %v1160, %v1154
    %v1503 = vpack.c.b16 %v1161, %v1155
    %v1504 = vpack.c.b16 %v1162, %v1156
    %v1505 = vpack.c.b16 %v1169, %v1163
    %v1506 = vpack.c.b16 %v1170, %v1164
    %v1507 = vpack.c.b16 %v1171, %v1165
    %v1508 = vpack.c.b16 %v1172, %v1166
    %v1509 = vpack.c.b16 %v1173, %v1167
    %v1510 = vpack.c.b16 %v1174, %v1168
    %v1511 = vpack.c.b16 %v1181, %v1175
    %v1512 = vpack.c.b16 %v1182, %v1176
    %v1513 = vpack.c.b16 %v1183, %v1177
    %v1514 = vpack.c.b16 %v1184, %v1178
    %v1515 = vpack.c.b16 %v1185, %v1179
    %v1516 = vpack.c.b16 %v1186, %v1180
    %v1517 = vpack.c.b16 %v1193, %v1187
    %v1518 = vpack.c.b16 %v1194, %v1188
    %v1519 = vpack.c.b16 %v1195, %v1189
    %v1520 = vpack.c.b16 %v1196, %v1190
    %v1521 = vpack.c.b16 %v1197, %v1191
    %v1522 = vpack.c.b16 %v1198, %v1192
    %v1523 = vpack.c.b16 %v1205, %v1199
    %v1524 = vpack.c.b16 %v1206, %v1200
    %v1525 = vpack.c.b16 %v1207, %v1201
    %v1526 = vpack.c.b16 %v1208, %v1202
    %v1527 = vpack.c.b16 %v1209, %v1203
    %v1528 = vpack.c.b16 %v1210, %v1204
    %v1529 = vpack.c.b16 %v1217, %v1211
    %v1530 = vpack.c.b16 %v1218, %v1212
    %v1531 = vpack.c.b16 %v1219, %v1213
    %v1532 = vpack.c.b16 %v1220, %v1214
    %v1533 = vpack.c.b16 %v1221, %v1215
    %v1534 = vpack.c.b16 %v1222, %v1216
    %v1535 = vpack.c.b16 %v1229, %v1223
    %v1536 = vpack.c.b16 %v1230, %v1224
    %v1537 = vpack.c.b16 %v1231, %v1225
    %v1538 = vpack.c.b16 %v1232, %v1226
    %v1539 = vpack.c.b16 %v1233, %v1227
    %v1540 = vpack.c.b16 %v1234, %v1228
    %v1541 = vpack.c.b16 %v1241, %v1235
    %v1542 = vpack.c.b16 %v1242, %v1236
    %v1543 = vpack.c.b16 %v1243, %v1237
    %v1544 = vpack.c.b16 %v1244, %v1238
    %v1545 = vpack.c.b16 %v1245, %v1239
    %v1546 = vpack.c.b16 %v1246, %v1240
    %v1547 = vpack.c.b16 %v1253, %v1247
    %v1548 = vpack.c.b16 %v1254, %v1248
    %v1549 = vpack.c.b16 %v1255, %v1249
    %v1550 = vpack.c.b16 %v1256, %v1250
    %v1551 = vpack.c.b16 %v1257, %v1251
    %v1552 = vpack.c.b16 %v1258, %v1252
    %v1553 = vpack.c.b16 %v1265, %v1259
    %v1554 = vpack.c.b16 %v1266, %v1260
    %v1555 = vpack.c.b16 %v1267, %v1261
    %v1556 = vpack.c.b16 %v1268, %v1262
    %v1557 = vpack.c.b16 %v1269, %v1263
    %v1558 = vpack.c.b16 %v1270, %v1264
    %1847 = vmatpush.bf16.msra.mxu0 %v1313
    %1848 = vmatpush.bf16.msra.mxu0 %v1307
    %1849 = vmatpush.bf16.msra.mxu0 %v1301
    %1850 = vmatpush.bf16.msra.mxu0 %v1295
    %1851 = vmatpush.bf16.msra.mxu0 %v1289
    %1852 = vmatpush.bf16.msra.mxu0 %v1283
    %1853 = vmatpush.bf16.msra.mxu0 %v1277
    %1854 = vmatpush.bf16.msra.mxu0 %v1271
    %1855 = vmatmul.bf16.gmra.mxu0 %v99
    %v1856 = vpop.f32.mrf.mxu0
    %v1857 = vadd.f32 %v395, %v1856
    %v1858 = vpop.f32.mrf.mxu0
    %1859 = vdwg.mxu0
    %1860 = vmatpush.bf16.msra.mxu0 %v1361
    %1861 = vmatpush.bf16.msra.mxu0 %v1355
    %1862 = vmatpush.bf16.msra.mxu0 %v1349
    %1863 = vmatpush.bf16.msra.mxu0 %v1343
    %1864 = vmatpush.bf16.msra.mxu0 %v1337
    %1865 = vmatpush.bf16.msra.mxu0 %v1331
    %1866 = vmatpush.bf16.msra.mxu0 %v1325
    %1867 = vmatpush.bf16.msra.mxu0 %v1319
    %1868 = vmatmul.bf16.gmra.mxu0 %v100
    %v1869 = vpop.f32.mrf.mxu0
    %v1870 = vadd.f32 %v1857, %v1869
    %v1871 = vpop.f32.mrf.mxu0
    %1872 = vdwg.mxu0
    %1873 = vmatpush.bf16.msra.mxu0 %v1409
    %1874 = vmatpush.bf16.msra.mxu0 %v1403
    %1875 = vmatpush.bf16.msra.mxu0 %v1397
    %1876 = vmatpush.bf16.msra.mxu0 %v1391
    %1877 = vmatpush.bf16.msra.mxu0 %v1385
    %1878 = vmatpush.bf16.msra.mxu0 %v1379
    %1879 = vmatpush.bf16.msra.mxu0 %v1373
    %1880 = vmatpush.bf16.msra.mxu0 %v1367
    %1881 = vmatmul.bf16.gmra.mxu0 %v101
    %v1882 = vpop.f32.mrf.mxu0
    %v1883 = vadd.f32 %v1870, %v1882
    %v1884 = vpop.f32.mrf.mxu0
    %1885 = vdwg.mxu0
    %1886 = vmatpush.bf16.msra.mxu0 %v1457
    %1887 = vmatpush.bf16.msra.mxu0 %v1451
    %1888 = vmatpush.bf16.msra.mxu0 %v1445
    %1889 = vmatpush.bf16.msra.mxu0 %v1439
    %1890 = vmatpush.bf16.msra.mxu0 %v1433
    %1891 = vmatpush.bf16.msra.mxu0 %v1427
    %1892 = vmatpush.bf16.msra.mxu0 %v1421
    %1893 = vmatpush.bf16.msra.mxu0 %v1415
    %1894 = vmatmul.bf16.gmra.mxu0 %v102
    %v1895 = vpop.f32.mrf.mxu0
    %v1896 = vadd.f32 %v1883, %v1895
    %v1897 = vpop.f32.mrf.mxu0
    %1898 = vdwg.mxu0
    %1899 = vmatpush.bf16.msra.mxu0 %v1505
    %1900 = vmatpush.bf16.msra.mxu0 %v1499
    %1901 = vmatpush.bf16.msra.mxu0 %v1493
    %1902 = vmatpush.bf16.msra.mxu0 %v1487
    %1903 = vmatpush.bf16.msra.mxu0 %v1481
    %1904 = vmatpush.bf16.msra.mxu0 %v1475
    %1905 = vmatpush.bf16.msra.mxu0 %v1469
    %1906 = vmatpush.bf16.msra.mxu0 %v1463
    %1907 = vmatmul.bf16.gmra.mxu0 %v103
    %v1908 = vpop.f32.mrf.mxu0
    %v1909 = vadd.f32 %v1896, %v1908
    %v1910 = vpop.f32.mrf.mxu0
    %1911 = vdwg.mxu0
    %1912 = vmatpush.bf16.msra.mxu0 %v1553
    %1913 = vmatpush.bf16.msra.mxu0 %v1547
    %1914 = vmatpush.bf16.msra.mxu0 %v1541
    %1915 = vmatpush.bf16.msra.mxu0 %v1535
    %1916 = vmatpush.bf16.msra.mxu0 %v1529
    %1917 = vmatpush.bf16.msra.mxu0 %v1523
    %1918 = vmatpush.bf16.msra.mxu0 %v1517
    %1919 = vmatpush.bf16.msra.mxu0 %v1511
    %1920 = vmatmul.bf16.gmra.mxu0 %v104
    %v1921 = vpop.f32.mrf.mxu0
    %v1922 = vadd.f32 %v1909, %v1921
    %v1923 = vpop.f32.mrf.mxu0
    %1924 = vdwg.mxu0
    %1925 = vmatpush.bf16.msra.mxu0 %v1314
    %1926 = vmatpush.bf16.msra.mxu0 %v1308
    %1927 = vmatpush.bf16.msra.mxu0 %v1302
    %1928 = vmatpush.bf16.msra.mxu0 %v1296
    %1929 = vmatpush.bf16.msra.mxu0 %v1290
    %1930 = vmatpush.bf16.msra.mxu0 %v1284
    %1931 = vmatpush.bf16.msra.mxu0 %v1278
    %1932 = vmatpush.bf16.msra.mxu0 %v1272
    %1933 = vmatmul.bf16.gmra.mxu0 %v99
    %v1934 = vpop.f32.mrf.mxu0
    %v1935 = vadd.f32 %v396, %v1934
    %v1936 = vpop.f32.mrf.mxu0
    %1937 = vdwg.mxu0
    %1938 = vmatpush.bf16.msra.mxu0 %v1362
    %1939 = vmatpush.bf16.msra.mxu0 %v1356
    %1940 = vmatpush.bf16.msra.mxu0 %v1350
    %1941 = vmatpush.bf16.msra.mxu0 %v1344
    %1942 = vmatpush.bf16.msra.mxu0 %v1338
    %1943 = vmatpush.bf16.msra.mxu0 %v1332
    %1944 = vmatpush.bf16.msra.mxu0 %v1326
    %1945 = vmatpush.bf16.msra.mxu0 %v1320
    %1946 = vmatmul.bf16.gmra.mxu0 %v100
    %v1947 = vpop.f32.mrf.mxu0
    %v1948 = vadd.f32 %v1935, %v1947
    %v1949 = vpop.f32.mrf.mxu0
    %1950 = vdwg.mxu0
    %1951 = vmatpush.bf16.msra.mxu0 %v1410
    %1952 = vmatpush.bf16.msra.mxu0 %v1404
    %1953 = vmatpush.bf16.msra.mxu0 %v1398
    %1954 = vmatpush.bf16.msra.mxu0 %v1392
    %1955 = vmatpush.bf16.msra.mxu0 %v1386
    %1956 = vmatpush.bf16.msra.mxu0 %v1380
    %1957 = vmatpush.bf16.msra.mxu0 %v1374
    %1958 = vmatpush.bf16.msra.mxu0 %v1368
    %1959 = vmatmul.bf16.gmra.mxu0 %v101
    %v1960 = vpop.f32.mrf.mxu0
    %v1961 = vadd.f32 %v1948, %v1960
    %v1962 = vpop.f32.mrf.mxu0
    %1963 = vdwg.mxu0
    %1964 = vmatpush.bf16.msra.mxu0 %v1458
    %1965 = vmatpush.bf16.msra.mxu0 %v1452
    %1966 = vmatpush.bf16.msra.mxu0 %v1446
    %1967 = vmatpush.bf16.msra.mxu0 %v1440
    %1968 = vmatpush.bf16.msra.mxu0 %v1434
    %1969 = vmatpush.bf16.msra.mxu0 %v1428
    %1970 = vmatpush.bf16.msra.mxu0 %v1422
    %1971 = vmatpush.bf16.msra.mxu0 %v1416
    %1972 = vmatmul.bf16.gmra.mxu0 %v102
    %v1973 = vpop.f32.mrf.mxu0
    %v1974 = vadd.f32 %v1961, %v1973
    %v1975 = vpop.f32.mrf.mxu0
    %1976 = vdwg.mxu0
    %1977 = vmatpush.bf16.msra.mxu0 %v1506
    %1978 = vmatpush.bf16.msra.mxu0 %v1500
    %1979 = vmatpush.bf16.msra.mxu0 %v1494
    %1980 = vmatpush.bf16.msra.mxu0 %v1488
    %1981 = vmatpush.bf16.msra.mxu0 %v1482
    %1982 = vmatpush.bf16.msra.mxu0 %v1476
    %1983 = vmatpush.bf16.msra.mxu0 %v1470
    %1984 = vmatpush.bf16.msra.mxu0 %v1464
    %1985 = vmatmul.bf16.gmra.mxu0 %v103
    %v1986 = vpop.f32.mrf.mxu0
    %v1987 = vadd.f32 %v1974, %v1986
    %v1988 = vpop.f32.mrf.mxu0
    %1989 = vdwg.mxu0
    %1990 = vmatpush.bf16.msra.mxu0 %v1554
    %1991 = vmatpush.bf16.msra.mxu0 %v1548
    %1992 = vmatpush.bf16.msra.mxu0 %v1542
    %1993 = vmatpush.bf16.msra.mxu0 %v1536
    %1994 = vmatpush.bf16.msra.mxu0 %v1530
    %1995 = vmatpush.bf16.msra.mxu0 %v1524
    %1996 = vmatpush.bf16.msra.mxu0 %v1518
    %1997 = vmatpush.bf16.msra.mxu0 %v1512
    %1998 = vmatmul.bf16.gmra.mxu0 %v104
    %v1999 = vpop.f32.mrf.mxu0
    %v2000 = vadd.f32 %v1987, %v1999
    %v2001 = vpop.f32.mrf.mxu0
    %2002 = vdwg.mxu0
    %2003 = vmatpush.bf16.msra.mxu0 %v1315
    %2004 = vmatpush.bf16.msra.mxu0 %v1309
    %2005 = vmatpush.bf16.msra.mxu0 %v1303
    %2006 = vmatpush.bf16.msra.mxu0 %v1297
    %2007 = vmatpush.bf16.msra.mxu0 %v1291
    %2008 = vmatpush.bf16.msra.mxu0 %v1285
    %2009 = vmatpush.bf16.msra.mxu0 %v1279
    %2010 = vmatpush.bf16.msra.mxu0 %v1273
    %2011 = vmatmul.bf16.gmra.mxu0 %v99
    %v2012 = vpop.f32.mrf.mxu0
    %v2013 = vadd.f32 %v397, %v2012
    %v2014 = vpop.f32.mrf.mxu0
    %2015 = vdwg.mxu0
    %2016 = vmatpush.bf16.msra.mxu0 %v1363
    %2017 = vmatpush.bf16.msra.mxu0 %v1357
    %2018 = vmatpush.bf16.msra.mxu0 %v1351
    %2019 = vmatpush.bf16.msra.mxu0 %v1345
    %2020 = vmatpush.bf16.msra.mxu0 %v1339
    %2021 = vmatpush.bf16.msra.mxu0 %v1333
    %2022 = vmatpush.bf16.msra.mxu0 %v1327
    %2023 = vmatpush.bf16.msra.mxu0 %v1321
    %2024 = vmatmul.bf16.gmra.mxu0 %v100
    %v2025 = vpop.f32.mrf.mxu0
    %v2026 = vadd.f32 %v2013, %v2025
    %v2027 = vpop.f32.mrf.mxu0
    %2028 = vdwg.mxu0
    %2029 = vmatpush.bf16.msra.mxu0 %v1411
    %2030 = vmatpush.bf16.msra.mxu0 %v1405
    %2031 = vmatpush.bf16.msra.mxu0 %v1399
    %2032 = vmatpush.bf16.msra.mxu0 %v1393
    %2033 = vmatpush.bf16.msra.mxu0 %v1387
    %2034 = vmatpush.bf16.msra.mxu0 %v1381
    %2035 = vmatpush.bf16.msra.mxu0 %v1375
    %2036 = vmatpush.bf16.msra.mxu0 %v1369
    %2037 = vmatmul.bf16.gmra.mxu0 %v101
    %v2038 = vpop.f32.mrf.mxu0
    %v2039 = vadd.f32 %v2026, %v2038
    %v2040 = vpop.f32.mrf.mxu0
    %2041 = vdwg.mxu0
    %2042 = vmatpush.bf16.msra.mxu0 %v1459
    %2043 = vmatpush.bf16.msra.mxu0 %v1453
    %2044 = vmatpush.bf16.msra.mxu0 %v1447
    %2045 = vmatpush.bf16.msra.mxu0 %v1441
    %2046 = vmatpush.bf16.msra.mxu0 %v1435
    %2047 = vmatpush.bf16.msra.mxu0 %v1429
    %2048 = vmatpush.bf16.msra.mxu0 %v1423
    %2049 = vmatpush.bf16.msra.mxu0 %v1417
    %2050 = vmatmul.bf16.gmra.mxu0 %v102
    %v2051 = vpop.f32.mrf.mxu0
    %v2052 = vadd.f32 %v2039, %v2051
    %v2053 = vpop.f32.mrf.mxu0
    %2054 = vdwg.mxu0
    %2055 = vmatpush.bf16.msra.mxu0 %v1507
    %2056 = vmatpush.bf16.msra.mxu0 %v1501
    %2057 = vmatpush.bf16.msra.mxu0 %v1495
    %2058 = vmatpush.bf16.msra.mxu0 %v1489
    %2059 = vmatpush.bf16.msra.mxu0 %v1483
    %2060 = vmatpush.bf16.msra.mxu0 %v1477
    %2061 = vmatpush.bf16.msra.mxu0 %v1471
    %2062 = vmatpush.bf16.msra.mxu0 %v1465
    %2063 = vmatmul.bf16.gmra.mxu0 %v103
    %v2064 = vpop.f32.mrf.mxu0
    %v2065 = vadd.f32 %v2052, %v2064
    %v2066 = vpop.f32.mrf.mxu0
    %2067 = vdwg.mxu0
    %2068 = vmatpush.bf16.msra.mxu0 %v1555
    %2069 = vmatpush.bf16.msra.mxu0 %v1549
    %2070 = vmatpush.bf16.msra.mxu0 %v1543
    %2071 = vmatpush.bf16.msra.mxu0 %v1537
    %2072 = vmatpush.bf16.msra.mxu0 %v1531
    %2073 = vmatpush.bf16.msra.mxu0 %v1525
    %2074 = vmatpush.bf16.msra.mxu0 %v1519
    %2075 = vmatpush.bf16.msra.mxu0 %v1513
    %2076 = vmatmul.bf16.gmra.mxu0 %v104
    %v2077 = vpop.f32.mrf.mxu0
    %v2078 = vadd.f32 %v2065, %v2077
    %v2079 = vpop.f32.mrf.mxu0
    %2080 = vdwg.mxu0
    %2081 = vmatpush.bf16.msra.mxu0 %v1316
    %2082 = vmatpush.bf16.msra.mxu0 %v1310
    %2083 = vmatpush.bf16.msra.mxu0 %v1304
    %2084 = vmatpush.bf16.msra.mxu0 %v1298
    %2085 = vmatpush.bf16.msra.mxu0 %v1292
    %2086 = vmatpush.bf16.msra.mxu0 %v1286
    %2087 = vmatpush.bf16.msra.mxu0 %v1280
    %2088 = vmatpush.bf16.msra.mxu0 %v1274
    %2089 = vmatmul.bf16.gmra.mxu0 %v99
    %v2090 = vpop.f32.mrf.mxu0
    %v2091 = vadd.f32 %v398, %v2090
    %v2092 = vpop.f32.mrf.mxu0
    %2093 = vdwg.mxu0
    %2094 = vmatpush.bf16.msra.mxu0 %v1364
    %2095 = vmatpush.bf16.msra.mxu0 %v1358
    %2096 = vmatpush.bf16.msra.mxu0 %v1352
    %2097 = vmatpush.bf16.msra.mxu0 %v1346
    %2098 = vmatpush.bf16.msra.mxu0 %v1340
    %2099 = vmatpush.bf16.msra.mxu0 %v1334
    %2100 = vmatpush.bf16.msra.mxu0 %v1328
    %2101 = vmatpush.bf16.msra.mxu0 %v1322
    %2102 = vmatmul.bf16.gmra.mxu0 %v100
    %v2103 = vpop.f32.mrf.mxu0
    %v2104 = vadd.f32 %v2091, %v2103
    %v2105 = vpop.f32.mrf.mxu0
    %2106 = vdwg.mxu0
    %2107 = vmatpush.bf16.msra.mxu0 %v1412
    %2108 = vmatpush.bf16.msra.mxu0 %v1406
    %2109 = vmatpush.bf16.msra.mxu0 %v1400
    %2110 = vmatpush.bf16.msra.mxu0 %v1394
    %2111 = vmatpush.bf16.msra.mxu0 %v1388
    %2112 = vmatpush.bf16.msra.mxu0 %v1382
    %2113 = vmatpush.bf16.msra.mxu0 %v1376
    %2114 = vmatpush.bf16.msra.mxu0 %v1370
    %2115 = vmatmul.bf16.gmra.mxu0 %v101
    %v2116 = vpop.f32.mrf.mxu0
    %v2117 = vadd.f32 %v2104, %v2116
    %v2118 = vpop.f32.mrf.mxu0
    %2119 = vdwg.mxu0
    %2120 = vmatpush.bf16.msra.mxu0 %v1460
    %2121 = vmatpush.bf16.msra.mxu0 %v1454
    %2122 = vmatpush.bf16.msra.mxu0 %v1448
    %2123 = vmatpush.bf16.msra.mxu0 %v1442
    %2124 = vmatpush.bf16.msra.mxu0 %v1436
    %2125 = vmatpush.bf16.msra.mxu0 %v1430
    %2126 = vmatpush.bf16.msra.mxu0 %v1424
    %2127 = vmatpush.bf16.msra.mxu0 %v1418
    %2128 = vmatmul.bf16.gmra.mxu0 %v102
    %v2129 = vpop.f32.mrf.mxu0
    %v2130 = vadd.f32 %v2117, %v2129
    %v2131 = vpop.f32.mrf.mxu0
    %2132 = vdwg.mxu0
    %2133 = vmatpush.bf16.msra.mxu0 %v1508
    %2134 = vmatpush.bf16.msra.mxu0 %v1502
    %2135 = vmatpush.bf16.msra.mxu0 %v1496
    %2136 = vmatpush.bf16.msra.mxu0 %v1490
    %2137 = vmatpush.bf16.msra.mxu0 %v1484
    %2138 = vmatpush.bf16.msra.mxu0 %v1478
    %2139 = vmatpush.bf16.msra.mxu0 %v1472
    %2140 = vmatpush.bf16.msra.mxu0 %v1466
    %2141 = vmatmul.bf16.gmra.mxu0 %v103
    %v2142 = vpop.f32.mrf.mxu0
    %v2143 = vadd.f32 %v2130, %v2142
    %v2144 = vpop.f32.mrf.mxu0
    %2145 = vdwg.mxu0
    %2146 = vmatpush.bf16.msra.mxu0 %v1556
    %2147 = vmatpush.bf16.msra.mxu0 %v1550
    %2148 = vmatpush.bf16.msra.mxu0 %v1544
    %2149 = vmatpush.bf16.msra.mxu0 %v1538
    %2150 = vmatpush.bf16.msra.mxu0 %v1532
    %2151 = vmatpush.bf16.msra.mxu0 %v1526
    %2152 = vmatpush.bf16.msra.mxu0 %v1520
    %2153 = vmatpush.bf16.msra.mxu0 %v1514
    %2154 = vmatmul.bf16.gmra.mxu0 %v104
    %v2155 = vpop.f32.mrf.mxu0
    %v2156 = vadd.f32 %v2143, %v2155
    %v2157 = vpop.f32.mrf.mxu0
    %2158 = vdwg.mxu0
    %2159 = vmatpush.bf16.msra.mxu0 %v1317
    %2160 = vmatpush.bf16.msra.mxu0 %v1311
    %2161 = vmatpush.bf16.msra.mxu0 %v1305
    %2162 = vmatpush.bf16.msra.mxu0 %v1299
    %2163 = vmatpush.bf16.msra.mxu0 %v1293
    %2164 = vmatpush.bf16.msra.mxu0 %v1287
    %2165 = vmatpush.bf16.msra.mxu0 %v1281
    %2166 = vmatpush.bf16.msra.mxu0 %v1275
    %2167 = vmatmul.bf16.gmra.mxu0 %v99
    %v2168 = vpop.f32.mrf.mxu0
    %v2169 = vadd.f32 %v399, %v2168
    %v2170 = vpop.f32.mrf.mxu0
    %2171 = vdwg.mxu0
    %2172 = vmatpush.bf16.msra.mxu0 %v1365
    %2173 = vmatpush.bf16.msra.mxu0 %v1359
    %2174 = vmatpush.bf16.msra.mxu0 %v1353
    %2175 = vmatpush.bf16.msra.mxu0 %v1347
    %2176 = vmatpush.bf16.msra.mxu0 %v1341
    %2177 = vmatpush.bf16.msra.mxu0 %v1335
    %2178 = vmatpush.bf16.msra.mxu0 %v1329
    %2179 = vmatpush.bf16.msra.mxu0 %v1323
    %2180 = vmatmul.bf16.gmra.mxu0 %v100
    %v2181 = vpop.f32.mrf.mxu0
    %v2182 = vadd.f32 %v2169, %v2181
    %v2183 = vpop.f32.mrf.mxu0
    %2184 = vdwg.mxu0
    %2185 = vmatpush.bf16.msra.mxu0 %v1413
    %2186 = vmatpush.bf16.msra.mxu0 %v1407
    %2187 = vmatpush.bf16.msra.mxu0 %v1401
    %2188 = vmatpush.bf16.msra.mxu0 %v1395
    %2189 = vmatpush.bf16.msra.mxu0 %v1389
    %2190 = vmatpush.bf16.msra.mxu0 %v1383
    %2191 = vmatpush.bf16.msra.mxu0 %v1377
    %2192 = vmatpush.bf16.msra.mxu0 %v1371
    %2193 = vmatmul.bf16.gmra.mxu0 %v101
    %v2194 = vpop.f32.mrf.mxu0
    %v2195 = vadd.f32 %v2182, %v2194
    %v2196 = vpop.f32.mrf.mxu0
    %2197 = vdwg.mxu0
    %2198 = vmatpush.bf16.msra.mxu0 %v1461
    %2199 = vmatpush.bf16.msra.mxu0 %v1455
    %2200 = vmatpush.bf16.msra.mxu0 %v1449
    %2201 = vmatpush.bf16.msra.mxu0 %v1443
    %2202 = vmatpush.bf16.msra.mxu0 %v1437
    %2203 = vmatpush.bf16.msra.mxu0 %v1431
    %2204 = vmatpush.bf16.msra.mxu0 %v1425
    %2205 = vmatpush.bf16.msra.mxu0 %v1419
    %2206 = vmatmul.bf16.gmra.mxu0 %v102
    %v2207 = vpop.f32.mrf.mxu0
    %v2208 = vadd.f32 %v2195, %v2207
    %v2209 = vpop.f32.mrf.mxu0
    %2210 = vdwg.mxu0
    %2211 = vmatpush.bf16.msra.mxu0 %v1509
    %2212 = vmatpush.bf16.msra.mxu0 %v1503
    %2213 = vmatpush.bf16.msra.mxu0 %v1497
    %2214 = vmatpush.bf16.msra.mxu0 %v1491
    %2215 = vmatpush.bf16.msra.mxu0 %v1485
    %2216 = vmatpush.bf16.msra.mxu0 %v1479
    %2217 = vmatpush.bf16.msra.mxu0 %v1473
    %2218 = vmatpush.bf16.msra.mxu0 %v1467
    %2219 = vmatmul.bf16.gmra.mxu0 %v103
    %v2220 = vpop.f32.mrf.mxu0
    %v2221 = vadd.f32 %v2208, %v2220
    %v2222 = vpop.f32.mrf.mxu0
    %2223 = vdwg.mxu0
    %2224 = vmatpush.bf16.msra.mxu0 %v1557
    %2225 = vmatpush.bf16.msra.mxu0 %v1551
    %2226 = vmatpush.bf16.msra.mxu0 %v1545
    %2227 = vmatpush.bf16.msra.mxu0 %v1539
    %2228 = vmatpush.bf16.msra.mxu0 %v1533
    %2229 = vmatpush.bf16.msra.mxu0 %v1527
    %2230 = vmatpush.bf16.msra.mxu0 %v1521
    %2231 = vmatpush.bf16.msra.mxu0 %v1515
    %2232 = vmatmul.bf16.gmra.mxu0 %v104
    %v2233 = vpop.f32.mrf.mxu0
    %v2234 = vadd.f32 %v2221, %v2233
    %v2235 = vpop.f32.mrf.mxu0
    %2236 = vdwg.mxu0
    %2237 = vmatpush.bf16.msra.mxu0 %v1318
    %2238 = vmatpush.bf16.msra.mxu0 %v1312
    %2239 = vmatpush.bf16.msra.mxu0 %v1306
    %2240 = vmatpush.bf16.msra.mxu0 %v1300
    %2241 = vmatpush.bf16.msra.mxu0 %v1294
    %2242 = vmatpush.bf16.msra.mxu0 %v1288
    %2243 = vmatpush.bf16.msra.mxu0 %v1282
    %2244 = vmatpush.bf16.msra.mxu0 %v1276
    %2245 = vmatmul.bf16.gmra.mxu0 %v99
    %v2246 = vpop.f32.mrf.mxu0
    %v2247 = vadd.f32 %v400, %v2246
    %v2248 = vpop.f32.mrf.mxu0
    %2249 = vdwg.mxu0
    %2250 = vmatpush.bf16.msra.mxu0 %v1366
    %2251 = vmatpush.bf16.msra.mxu0 %v1360
    %2252 = vmatpush.bf16.msra.mxu0 %v1354
    %2253 = vmatpush.bf16.msra.mxu0 %v1348
    %2254 = vmatpush.bf16.msra.mxu0 %v1342
    %2255 = vmatpush.bf16.msra.mxu0 %v1336
    %2256 = vmatpush.bf16.msra.mxu0 %v1330
    %2257 = vmatpush.bf16.msra.mxu0 %v1324
    %2258 = vmatmul.bf16.gmra.mxu0 %v100
    %v2259 = vpop.f32.mrf.mxu0
    %v2260 = vadd.f32 %v2247, %v2259
    %v2261 = vpop.f32.mrf.mxu0
    %2262 = vdwg.mxu0
    %2263 = vmatpush.bf16.msra.mxu0 %v1414
    %2264 = vmatpush.bf16.msra.mxu0 %v1408
    %2265 = vmatpush.bf16.msra.mxu0 %v1402
    %2266 = vmatpush.bf16.msra.mxu0 %v1396
    %2267 = vmatpush.bf16.msra.mxu0 %v1390
    %2268 = vmatpush.bf16.msra.mxu0 %v1384
    %2269 = vmatpush.bf16.msra.mxu0 %v1378
    %2270 = vmatpush.bf16.msra.mxu0 %v1372
    %2271 = vmatmul.bf16.gmra.mxu0 %v101
    %v2272 = vpop.f32.mrf.mxu0
    %v2273 = vadd.f32 %v2260, %v2272
    %v2274 = vpop.f32.mrf.mxu0
    %2275 = vdwg.mxu0
    %2276 = vmatpush.bf16.msra.mxu0 %v1462
    %2277 = vmatpush.bf16.msra.mxu0 %v1456
    %2278 = vmatpush.bf16.msra.mxu0 %v1450
    %2279 = vmatpush.bf16.msra.mxu0 %v1444
    %2280 = vmatpush.bf16.msra.mxu0 %v1438
    %2281 = vmatpush.bf16.msra.mxu0 %v1432
    %2282 = vmatpush.bf16.msra.mxu0 %v1426
    %2283 = vmatpush.bf16.msra.mxu0 %v1420
    %2284 = vmatmul.bf16.gmra.mxu0 %v102
    %v2285 = vpop.f32.mrf.mxu0
    %v2286 = vadd.f32 %v2273, %v2285
    %v2287 = vpop.f32.mrf.mxu0
    %2288 = vdwg.mxu0
    %2289 = vmatpush.bf16.msra.mxu0 %v1510
    %2290 = vmatpush.bf16.msra.mxu0 %v1504
    %2291 = vmatpush.bf16.msra.mxu0 %v1498
    %2292 = vmatpush.bf16.msra.mxu0 %v1492
    %2293 = vmatpush.bf16.msra.mxu0 %v1486
    %2294 = vmatpush.bf16.msra.mxu0 %v1480
    %2295 = vmatpush.bf16.msra.mxu0 %v1474
    %2296 = vmatpush.bf16.msra.mxu0 %v1468
    %2297 = vmatmul.bf16.gmra.mxu0 %v103
    %v2298 = vpop.f32.mrf.mxu0
    %v2299 = vadd.f32 %v2286, %v2298
    %v2300 = vpop.f32.mrf.mxu0
    %2301 = vdwg.mxu0
    %2302 = vmatpush.bf16.msra.mxu0 %v1558
    %2303 = vmatpush.bf16.msra.mxu0 %v1552
    %2304 = vmatpush.bf16.msra.mxu0 %v1546
    %2305 = vmatpush.bf16.msra.mxu0 %v1540
    %2306 = vmatpush.bf16.msra.mxu0 %v1534
    %2307 = vmatpush.bf16.msra.mxu0 %v1528
    %2308 = vmatpush.bf16.msra.mxu0 %v1522
    %2309 = vmatpush.bf16.msra.mxu0 %v1516
    %2310 = vmatmul.bf16.gmra.mxu0 %v104
    %v2311 = vpop.f32.mrf.mxu0
    %v2312 = vadd.f32 %v2299, %v2311
    %v2313 = vpop.f32.mrf.mxu0
    %2314 = vdwg.mxu0
    %v2315 = vmul.f32 %v1922, 0.5
    %v2316 = vmul.f32 %v2000, 0.5
    %v2317 = vmul.f32 %v2078, 0.5
    %v2318 = vmul.f32 %v2156, 0.5
    %v2319 = vmul.f32 %v2234, 0.5
    %v2320 = vmul.f32 %v2312, 0.5
    %v2321 = vmul.f32 %v1922, 0.70710677
    %v2322 = vmul.f32 %v2000, 0.70710677
    %v2323 = vmul.f32 %v2078, 0.70710677
    %v2324 = vmul.f32 %v2156, 0.70710677
    %v2325 = vmul.f32 %v2234, 0.70710677
    %v2326 = vmul.f32 %v2312, 0.70710677
    %v2327 = vmul.f32 %v2321, %v2321
    %v2328 = vmin.f32 16.0, %v2327
    %v2329 = vmul.f32 %v2328, 2.1237322e-06
    %v2330 = vadd.f32 %v2329, 0.00028619796
    %v2331 = vmul.f32 %v2328, %v2330
    %v2332 = vadd.f32 %v2331, 0.0036580483
    %v2333 = vmul.f32 %v2328, %v2332
    %v2334 = vadd.f32 %v2333, 0.05243302
    %v2335 = vmul.f32 %v2328, %v2334
    %v2336 = vadd.f32 %v2335, 0.18741608
    %v2337 = vmul.f32 %v2328, %v2336
    %v2338 = vadd.f32 %v2337, 1.1283791
    %v2339 = vmul.f32 %v2321, %v2338
    %v2340 = vmul.f32 %v2328, 3.8918573e-05
    %v2341 = vadd.f32 %v2340, 0.001143296
    %v2342 = vmul.f32 %v2328, %v2341
    %v2343 = vadd.f32 %v2342, 0.014752088
    %v2344 = vmul.f32 %v2328, %v2343
    %v2345 = vadd.f32 %v2344, 0.112945676
    %v2346 = vmul.f32 %v2328, %v2345
    %v2347 = vadd.f32 %v2346, 0.4994258
    %v2348 = vmul.f32 %v2328, %v2347
    %v2349 = vadd.f32 %v2348, 1.0
    %v2350 = vrcp.pop %v2349
    %v2351 = vmul.f32 %v2349, %v2350
    %v2352 = vsub.f32 1.0, %v2351
    %v2353 = vmul.f32 %v2350, %v2352
    %v2354 = vadd.f32 %v2350, %v2353
    %vm2355 = vweird.f32 %v2349
    %vm2356 = vweird.f32 %v2350
    %vm2357 = vmor %vm2355, %vm2356
    %v2358 = vsel %vm2357, %v2350, %v2354
    %v2359 = vand.u32 2147483647, %v2349
    %vm2360 = vcmp.eq.f32.partialorder %v2359, 8.507059e+37
    %v2361 = vand.u32 %v2349, 2147483648
    %v2362 = vor.u32 1.1754944e-38, %v2361
    %v2363 = vsel %vm2360, %v2362, %v2358
    %v2364 = vmul.f32 %v2339, %v2363
    %v2365 = vmin.f32 %v2364, 1.0
    %v2366 = vmax.f32 %v2365, -1.0
    %v2367 = vmul.f32 %v2322, %v2322
    %v2368 = vmin.f32 16.0, %v2367
    %v2369 = vmul.f32 %v2368, 2.1237322e-06
    %v2370 = vadd.f32 %v2369, 0.00028619796
    %v2371 = vmul.f32 %v2368, %v2370
    %v2372 = vadd.f32 %v2371, 0.0036580483
    %v2373 = vmul.f32 %v2368, %v2372
    %v2374 = vadd.f32 %v2373, 0.05243302
    %v2375 = vmul.f32 %v2368, %v2374
    %v2376 = vadd.f32 %v2375, 0.18741608
    %v2377 = vmul.f32 %v2368, %v2376
    %v2378 = vadd.f32 %v2377, 1.1283791
    %v2379 = vmul.f32 %v2322, %v2378
    %v2380 = vmul.f32 %v2368, 3.8918573e-05
    %v2381 = vadd.f32 %v2380, 0.001143296
    %v2382 = vmul.f32 %v2368, %v2381
    %v2383 = vadd.f32 %v2382, 0.014752088
    %v2384 = vmul.f32 %v2368, %v2383
    %v2385 = vadd.f32 %v2384, 0.112945676
    %v2386 = vmul.f32 %v2368, %v2385
    %v2387 = vadd.f32 %v2386, 0.4994258
    %v2388 = vmul.f32 %v2368, %v2387
    %v2389 = vadd.f32 %v2388, 1.0
    %v2390 = vrcp.pop %v2389
    %v2391 = vmul.f32 %v2389, %v2390
    %v2392 = vsub.f32 1.0, %v2391
    %v2393 = vmul.f32 %v2390, %v2392
    %v2394 = vadd.f32 %v2390, %v2393
    %vm2395 = vweird.f32 %v2389
    %vm2396 = vweird.f32 %v2390
    %vm2397 = vmor %vm2395, %vm2396
    %v2398 = vsel %vm2397, %v2390, %v2394
    %v2399 = vand.u32 2147483647, %v2389
    %vm2400 = vcmp.eq.f32.partialorder %v2399, 8.507059e+37
    %v2401 = vand.u32 %v2389, 2147483648
    %v2402 = vor.u32 1.1754944e-38, %v2401
    %v2403 = vsel %vm2400, %v2402, %v2398
    %v2404 = vmul.f32 %v2379, %v2403
    %v2405 = vmin.f32 %v2404, 1.0
    %v2406 = vmax.f32 %v2405, -1.0
    %v2407 = vmul.f32 %v2323, %v2323
    %v2408 = vmin.f32 16.0, %v2407
    %v2409 = vmul.f32 %v2408, 2.1237322e-06
    %v2410 = vadd.f32 %v2409, 0.00028619796
    %v2411 = vmul.f32 %v2408, %v2410
    %v2412 = vadd.f32 %v2411, 0.0036580483
    %v2413 = vmul.f32 %v2408, %v2412
    %v2414 = vadd.f32 %v2413, 0.05243302
    %v2415 = vmul.f32 %v2408, %v2414
    %v2416 = vadd.f32 %v2415, 0.18741608
    %v2417 = vmul.f32 %v2408, %v2416
    %v2418 = vadd.f32 %v2417, 1.1283791
    %v2419 = vmul.f32 %v2323, %v2418
    %v2420 = vmul.f32 %v2408, 3.8918573e-05
    %v2421 = vadd.f32 %v2420, 0.001143296
    %v2422 = vmul.f32 %v2408, %v2421
    %v2423 = vadd.f32 %v2422, 0.014752088
    %v2424 = vmul.f32 %v2408, %v2423
    %v2425 = vadd.f32 %v2424, 0.112945676
    %v2426 = vmul.f32 %v2408, %v2425
    %v2427 = vadd.f32 %v2426, 0.4994258
    %v2428 = vmul.f32 %v2408, %v2427
    %v2429 = vadd.f32 %v2428, 1.0
    %v2430 = vrcp.pop %v2429
    %v2431 = vmul.f32 %v2429, %v2430
    %v2432 = vsub.f32 1.0, %v2431
    %v2433 = vmul.f32 %v2430, %v2432
    %v2434 = vadd.f32 %v2430, %v2433
    %vm2435 = vweird.f32 %v2429
    %vm2436 = vweird.f32 %v2430
    %vm2437 = vmor %vm2435, %vm2436
    %v2438 = vsel %vm2437, %v2430, %v2434
    %v2439 = vand.u32 2147483647, %v2429
    %vm2440 = vcmp.eq.f32.partialorder %v2439, 8.507059e+37
    %v2441 = vand.u32 %v2429, 2147483648
    %v2442 = vor.u32 1.1754944e-38, %v2441
    %v2443 = vsel %vm2440, %v2442, %v2438
    %v2444 = vmul.f32 %v2419, %v2443
    %v2445 = vmin.f32 %v2444, 1.0
    %v2446 = vmax.f32 %v2445, -1.0
    %v2447 = vmul.f32 %v2324, %v2324
    %v2448 = vmin.f32 16.0, %v2447
    %v2449 = vmul.f32 %v2448, 2.1237322e-06
    %v2450 = vadd.f32 %v2449, 0.00028619796
    %v2451 = vmul.f32 %v2448, %v2450
    %v2452 = vadd.f32 %v2451, 0.0036580483
    %v2453 = vmul.f32 %v2448, %v2452
    %v2454 = vadd.f32 %v2453, 0.05243302
    %v2455 = vmul.f32 %v2448, %v2454
    %v2456 = vadd.f32 %v2455, 0.18741608
    %v2457 = vmul.f32 %v2448, %v2456
    %v2458 = vadd.f32 %v2457, 1.1283791
    %v2459 = vmul.f32 %v2324, %v2458
    %v2460 = vmul.f32 %v2448, 3.8918573e-05
    %v2461 = vadd.f32 %v2460, 0.001143296
    %v2462 = vmul.f32 %v2448, %v2461
    %v2463 = vadd.f32 %v2462, 0.014752088
    %v2464 = vmul.f32 %v2448, %v2463
    %v2465 = vadd.f32 %v2464, 0.112945676
    %v2466 = vmul.f32 %v2448, %v2465
    %v2467 = vadd.f32 %v2466, 0.4994258
    %v2468 = vmul.f32 %v2448, %v2467
    %v2469 = vadd.f32 %v2468, 1.0
    %v2470 = vrcp.pop %v2469
    %v2471 = vmul.f32 %v2469, %v2470
    %v2472 = vsub.f32 1.0, %v2471
    %v2473 = vmul.f32 %v2470, %v2472
    %v2474 = vadd.f32 %v2470, %v2473
    %vm2475 = vweird.f32 %v2469
    %vm2476 = vweird.f32 %v2470
    %vm2477 = vmor %vm2475, %vm2476
    %v2478 = vsel %vm2477, %v2470, %v2474
    %v2479 = vand.u32 2147483647, %v2469
    %vm2480 = vcmp.eq.f32.partialorder %v2479, 8.507059e+37
    %v2481 = vand.u32 %v2469, 2147483648
    %v2482 = vor.u32 1.1754944e-38, %v2481
    %v2483 = vsel %vm2480, %v2482, %v2478
    %v2484 = vmul.f32 %v2459, %v2483
    %v2485 = vmin.f32 %v2484, 1.0
    %v2486 = vmax.f32 %v2485, -1.0
    %v2487 = vmul.f32 %v2325, %v2325
    %v2488 = vmin.f32 16.0, %v2487
    %v2489 = vmul.f32 %v2488, 2.1237322e-06
    %v2490 = vadd.f32 %v2489, 0.00028619796
    %v2491 = vmul.f32 %v2488, %v2490
    %v2492 = vadd.f32 %v2491, 0.0036580483
    %v2493 = vmul.f32 %v2488, %v2492
    %v2494 = vadd.f32 %v2493, 0.05243302
    %v2495 = vmul.f32 %v2488, %v2494
    %v2496 = vadd.f32 %v2495, 0.18741608
    %v2497 = vmul.f32 %v2488, %v2496
    %v2498 = vadd.f32 %v2497, 1.1283791
    %v2499 = vmul.f32 %v2325, %v2498
    %v2500 = vmul.f32 %v2488, 3.8918573e-05
    %v2501 = vadd.f32 %v2500, 0.001143296
    %v2502 = vmul.f32 %v2488, %v2501
    %v2503 = vadd.f32 %v2502, 0.014752088
    %v2504 = vmul.f32 %v2488, %v2503
    %v2505 = vadd.f32 %v2504, 0.112945676
    %v2506 = vmul.f32 %v2488, %v2505
    %v2507 = vadd.f32 %v2506, 0.4994258
    %v2508 = vmul.f32 %v2488, %v2507
    %v2509 = vadd.f32 %v2508, 1.0
    %v2510 = vrcp.pop %v2509
    %v2511 = vmul.f32 %v2509, %v2510
    %v2512 = vsub.f32 1.0, %v2511
    %v2513 = vmul.f32 %v2510, %v2512
    %v2514 = vadd.f32 %v2510, %v2513
    %vm2515 = vweird.f32 %v2509
    %vm2516 = vweird.f32 %v2510
    %vm2517 = vmor %vm2515, %vm2516
    %v2518 = vsel %vm2517, %v2510, %v2514
    %v2519 = vand.u32 2147483647, %v2509
    %vm2520 = vcmp.eq.f32.partialorder %v2519, 8.507059e+37
    %v2521 = vand.u32 %v2509, 2147483648
    %v2522 = vor.u32 1.1754944e-38, %v2521
    %v2523 = vsel %vm2520, %v2522, %v2518
    %v2524 = vmul.f32 %v2499, %v2523
    %v2525 = vmin.f32 %v2524, 1.0
    %v2526 = vmax.f32 %v2525, -1.0
    %v2527 = vmul.f32 %v2326, %v2326
    %v2528 = vmin.f32 16.0, %v2527
    %v2529 = vmul.f32 %v2528, 2.1237322e-06
    %v2530 = vadd.f32 %v2529, 0.00028619796
    %v2531 = vmul.f32 %v2528, %v2530
    %v2532 = vadd.f32 %v2531, 0.0036580483
    %v2533 = vmul.f32 %v2528, %v2532
    %v2534 = vadd.f32 %v2533, 0.05243302
    %v2535 = vmul.f32 %v2528, %v2534
    %v2536 = vadd.f32 %v2535, 0.18741608
    %v2537 = vmul.f32 %v2528, %v2536
    %v2538 = vadd.f32 %v2537, 1.1283791
    %v2539 = vmul.f32 %v2326, %v2538
    %v2540 = vmul.f32 %v2528, 3.8918573e-05
    %v2541 = vadd.f32 %v2540, 0.001143296
    %v2542 = vmul.f32 %v2528, %v2541
    %v2543 = vadd.f32 %v2542, 0.014752088
    %v2544 = vmul.f32 %v2528, %v2543
    %v2545 = vadd.f32 %v2544, 0.112945676
    %v2546 = vmul.f32 %v2528, %v2545
    %v2547 = vadd.f32 %v2546, 0.4994258
    %v2548 = vmul.f32 %v2528, %v2547
    %v2549 = vadd.f32 %v2548, 1.0
    %v2550 = vrcp.pop %v2549
    %v2551 = vmul.f32 %v2549, %v2550
    %v2552 = vsub.f32 1.0, %v2551
    %v2553 = vmul.f32 %v2550, %v2552
    %v2554 = vadd.f32 %v2550, %v2553
    %vm2555 = vweird.f32 %v2549
    %vm2556 = vweird.f32 %v2550
    %vm2557 = vmor %vm2555, %vm2556
    %v2558 = vsel %vm2557, %v2550, %v2554
    %v2559 = vand.u32 2147483647, %v2549
    %vm2560 = vcmp.eq.f32.partialorder %v2559, 8.507059e+37
    %v2561 = vand.u32 %v2549, 2147483648
    %v2562 = vor.u32 1.1754944e-38, %v2561
    %v2563 = vsel %vm2560, %v2562, %v2558
    %v2564 = vmul.f32 %v2539, %v2563
    %v2565 = vmin.f32 %v2564, 1.0
    %v2566 = vmax.f32 %v2565, -1.0
    %v2567 = vadd.f32 %v2366, 1.0
    %v2568 = vadd.f32 %v2406, 1.0
    %v2569 = vadd.f32 %v2446, 1.0
    %v2570 = vadd.f32 %v2486, 1.0
    %v2571 = vadd.f32 %v2526, 1.0
    %v2572 = vadd.f32 %v2566, 1.0
    %v2573 = vmul.f32 %v2315, %v2567
    %v2574 = vmul.f32 %v2316, %v2568
    %v2575 = vmul.f32 %v2317, %v2569
    %v2576 = vmul.f32 %v2318, %v2570
    %v2577 = vmul.f32 %v2319, %v2571
    %v2578 = vmul.f32 %v2320, %v2572
    %v2579 = vpack.c.bf16 %v2573, %v2573
    %v2580 = vpack.c.bf16 %v2574, %v2574
    %v2581 = vpack.c.bf16 %v2575, %v2575
    %v2582 = vpack.c.bf16 %v2576, %v2576
    %v2583 = vpack.c.bf16 %v2577, %v2577
    %v2584 = vpack.c.bf16 %v2578, %v2578
    %v2585 = vld [vmem:[#allocation8] sm:$0xf]
    %v2586 = vld [vmem:[#allocation8 + $0x4] sm:$0xf]
    %v2587 = vld [vmem:[#allocation8 + $0x8] sm:$0xf]
    %v2588 = vld [vmem:[#allocation8 + $0xc] sm:$0xf]
    %v2589 = vld [vmem:[#allocation8 + $0x10] sm:$0xf]
    %v2590 = vld [vmem:[#allocation8 + $0x14] sm:$0xf]
    %v2591 = vld [vmem:[#allocation8 + $0x18] sm:$0xf]
    %v2592 = vld [vmem:[#allocation8 + $0x1c] sm:$0xf]
    %v2593 = vld [vmem:[#allocation8 + $0x20] sm:$0xf]
    %v2594 = vld [vmem:[#allocation8 + $0x24] sm:$0xf]
    %v2595 = vld [vmem:[#allocation8 + $0x28] sm:$0xf]
    %v2596 = vld [vmem:[#allocation8 + $0x2c] sm:$0xf]
    %v2597 = vld [vmem:[#allocation8 + $0x30] sm:$0xf]
    %v2598 = vld [vmem:[#allocation8 + $0x34] sm:$0xf]
    %v2599 = vld [vmem:[#allocation8 + $0x38] sm:$0xf]
    %v2600 = vld [vmem:[#allocation8 + $0x3c] sm:$0xf]
    %v2601 = vld [vmem:[#allocation8 + $0x40] sm:$0xf]
    %v2602 = vld [vmem:[#allocation8 + $0x44] sm:$0xf]
    %v2603 = vld [vmem:[#allocation8 + $0x48] sm:$0xf]
    %v2604 = vld [vmem:[#allocation8 + $0x4c] sm:$0xf]
    %v2605 = vld [vmem:[#allocation8 + $0x50] sm:$0xf]
    %v2606 = vld [vmem:[#allocation8 + $0x54] sm:$0xf]
    %v2607 = vld [vmem:[#allocation8 + $0x58] sm:$0xf]
    %v2608 = vld [vmem:[#allocation8 + $0x5c] sm:$0xf]
    %v2609 = vld [vmem:[#allocation8 + $0x60] sm:$0xf]
    %v2610 = vld [vmem:[#allocation8 + $0x64] sm:$0xf]
    %v2611 = vld [vmem:[#allocation8 + $0x68] sm:$0xf]
    %v2612 = vld [vmem:[#allocation8 + $0x6c] sm:$0xf]
    %v2613 = vld [vmem:[#allocation8 + $0x70] sm:$0xf]
    %v2614 = vld [vmem:[#allocation8 + $0x74] sm:$0xf]
    %v2615 = vld [vmem:[#allocation8 + $0x78] sm:$0xf]
    %v2616 = vld [vmem:[#allocation8 + $0x7c] sm:$0xf]
    %v2617 = vld [vmem:[#allocation8 + $0x80] sm:$0xf]
    %v2618 = vld [vmem:[#allocation8 + $0x84] sm:$0xf]
    %v2619 = vld [vmem:[#allocation8 + $0x88] sm:$0xf]
    %v2620 = vld [vmem:[#allocation8 + $0x8c] sm:$0xf]
    %v2621 = vld [vmem:[#allocation8 + $0x90] sm:$0xf]
    %v2622 = vld [vmem:[#allocation8 + $0x94] sm:$0xf]
    %v2623 = vld [vmem:[#allocation8 + $0x98] sm:$0xf]
    %v2624 = vld [vmem:[#allocation8 + $0x9c] sm:$0xf]
    %v2625 = vld [vmem:[#allocation8 + $0xa0] sm:$0xf]
    %v2626 = vld [vmem:[#allocation8 + $0xa4] sm:$0xf]
    %v2627 = vld [vmem:[#allocation8 + $0xa8] sm:$0xf]
    %v2628 = vld [vmem:[#allocation8 + $0xac] sm:$0xf]
    %v2629 = vld [vmem:[#allocation8 + $0xb0] sm:$0xf]
    %v2630 = vld [vmem:[#allocation8 + $0xb4] sm:$0xf]
    %v2631 = vld [vmem:[#allocation8 + $0xb8] sm:$0xf]
    %v2632 = vld [vmem:[#allocation8 + $0xbc] sm:$0xf]
    %v2633 = vld [vmem:[#allocation8 + $0xc0] sm:$0xf]
    %v2634 = vld [vmem:[#allocation8 + $0xc4] sm:$0xf]
    %v2635 = vld [vmem:[#allocation8 + $0xc8] sm:$0xf]
    %v2636 = vld [vmem:[#allocation8 + $0xcc] sm:$0xf]
    %v2637 = vld [vmem:[#allocation8 + $0xd0] sm:$0xf]
    %v2638 = vld [vmem:[#allocation8 + $0xd4] sm:$0xf]
    %v2639 = vld [vmem:[#allocation8 + $0xd8] sm:$0xf]
    %v2640 = vld [vmem:[#allocation8 + $0xdc] sm:$0xf]
    %v2641 = vld [vmem:[#allocation8 + $0xe0] sm:$0xf]
    %v2642 = vld [vmem:[#allocation8 + $0xe4] sm:$0xf]
    %v2643 = vld [vmem:[#allocation8 + $0xe8] sm:$0xf]
    %v2644 = vld [vmem:[#allocation8 + $0xec] sm:$0xf]
    %v2645 = vld [vmem:[#allocation8 + $0xf0] sm:$0xf]
    %v2646 = vld [vmem:[#allocation8 + $0xf4] sm:$0xf]
    %v2647 = vld [vmem:[#allocation8 + $0xf8] sm:$0xf]
    %v2648 = vld [vmem:[#allocation8 + $0xfc] sm:$0xf]
    %v2649 = vld [vmem:[#allocation8 + $0x100] sm:$0xf]
    %v2650 = vld [vmem:[#allocation8 + $0x104] sm:$0xf]
    %v2651 = vld [vmem:[#allocation8 + $0x108] sm:$0xf]
    %v2652 = vld [vmem:[#allocation8 + $0x10c] sm:$0xf]
    %v2653 = vld [vmem:[#allocation8 + $0x110] sm:$0xf]
    %v2654 = vld [vmem:[#allocation8 + $0x114] sm:$0xf]
    %v2655 = vld [vmem:[#allocation8 + $0x118] sm:$0xf]
    %v2656 = vld [vmem:[#allocation8 + $0x11c] sm:$0xf]
    %v2657 = vld [vmem:[#allocation8 + $0x120] sm:$0xf]
    %v2658 = vld [vmem:[#allocation8 + $0x124] sm:$0xf]
    %v2659 = vld [vmem:[#allocation8 + $0x128] sm:$0xf]
    %v2660 = vld [vmem:[#allocation8 + $0x12c] sm:$0xf]
    %v2661 = vld [vmem:[#allocation8 + $0x130] sm:$0xf]
    %v2662 = vld [vmem:[#allocation8 + $0x134] sm:$0xf]
    %v2663 = vld [vmem:[#allocation8 + $0x138] sm:$0xf]
    %v2664 = vld [vmem:[#allocation8 + $0x13c] sm:$0xf]
    %v2665 = vld [vmem:[#allocation8 + $0x140] sm:$0xf]
    %v2666 = vld [vmem:[#allocation8 + $0x144] sm:$0xf]
    %v2667 = vld [vmem:[#allocation8 + $0x148] sm:$0xf]
    %v2668 = vld [vmem:[#allocation8 + $0x14c] sm:$0xf]
    %v2669 = vld [vmem:[#allocation8 + $0x150] sm:$0xf]
    %v2670 = vld [vmem:[#allocation8 + $0x154] sm:$0xf]
    %v2671 = vld [vmem:[#allocation8 + $0x158] sm:$0xf]
    %v2672 = vld [vmem:[#allocation8 + $0x15c] sm:$0xf]
    %v2673 = vld [vmem:[#allocation8 + $0x160] sm:$0xf]
    %v2674 = vld [vmem:[#allocation8 + $0x164] sm:$0xf]
    %v2675 = vld [vmem:[#allocation8 + $0x168] sm:$0xf]
    %v2676 = vld [vmem:[#allocation8 + $0x16c] sm:$0xf]
    %v2677 = vld [vmem:[#allocation8 + $0x170] sm:$0xf]
    %v2678 = vld [vmem:[#allocation8 + $0x174] sm:$0xf]
    %v2679 = vld [vmem:[#allocation8 + $0x178] sm:$0xf]
    %v2680 = vld [vmem:[#allocation8 + $0x17c] sm:$0xf]
    %v2681 = vld [vmem:[#allocation10] sm:$0x1]
    %v2683 = vperm.slane %v2681, 0
    %v2781 = vunpack.c.l.b16 %v2585
    %v2782 = vunpack.c.l.b16 %v2586
    %v2783 = vunpack.c.l.b16 %v2587
    %v2784 = vunpack.c.l.b16 %v2588
    %v2785 = vunpack.c.l.b16 %v2589
    %v2786 = vunpack.c.l.b16 %v2590
    %v2787 = vunpack.c.l.b16 %v2591
    %v2788 = vunpack.c.l.b16 %v2592
    %v2789 = vunpack.c.l.b16 %v2593
    %v2790 = vunpack.c.l.b16 %v2594
    %v2791 = vunpack.c.l.b16 %v2595
    %v2792 = vunpack.c.l.b16 %v2596
    %v2793 = vunpack.c.l.b16 %v2597
    %v2794 = vunpack.c.l.b16 %v2598
    %v2795 = vunpack.c.l.b16 %v2599
    %v2796 = vunpack.c.l.b16 %v2600
    %v2797 = vunpack.c.l.b16 %v2601
    %v2798 = vunpack.c.l.b16 %v2602
    %v2799 = vunpack.c.l.b16 %v2603
    %v2800 = vunpack.c.l.b16 %v2604
    %v2801 = vunpack.c.l.b16 %v2605
    %v2802 = vunpack.c.l.b16 %v2606
    %v2803 = vunpack.c.l.b16 %v2607
    %v2804 = vunpack.c.l.b16 %v2608
    %v2805 = vunpack.c.l.b16 %v2609
    %v2806 = vunpack.c.l.b16 %v2610
    %v2807 = vunpack.c.l.b16 %v2611
    %v2808 = vunpack.c.l.b16 %v2612
    %v2809 = vunpack.c.l.b16 %v2613
    %v2810 = vunpack.c.l.b16 %v2614
    %v2811 = vunpack.c.l.b16 %v2615
    %v2812 = vunpack.c.l.b16 %v2616
    %v2813 = vunpack.c.l.b16 %v2617
    %v2814 = vunpack.c.l.b16 %v2618
    %v2815 = vunpack.c.l.b16 %v2619
    %v2816 = vunpack.c.l.b16 %v2620
    %v2817 = vunpack.c.l.b16 %v2621
    %v2818 = vunpack.c.l.b16 %v2622
    %v2819 = vunpack.c.l.b16 %v2623
    %v2820 = vunpack.c.l.b16 %v2624
    %v2821 = vunpack.c.l.b16 %v2625
    %v2822 = vunpack.c.l.b16 %v2626
    %v2823 = vunpack.c.l.b16 %v2627
    %v2824 = vunpack.c.l.b16 %v2628
    %v2825 = vunpack.c.l.b16 %v2629
    %v2826 = vunpack.c.l.b16 %v2630
    %v2827 = vunpack.c.l.b16 %v2631
    %v2828 = vunpack.c.l.b16 %v2632
    %v2829 = vunpack.c.l.b16 %v2633
    %v2830 = vunpack.c.l.b16 %v2634
    %v2831 = vunpack.c.l.b16 %v2635
    %v2832 = vunpack.c.l.b16 %v2636
    %v2833 = vunpack.c.l.b16 %v2637
    %v2834 = vunpack.c.l.b16 %v2638
    %v2835 = vunpack.c.l.b16 %v2639
    %v2836 = vunpack.c.l.b16 %v2640
    %v2837 = vunpack.c.l.b16 %v2641
    %v2838 = vunpack.c.l.b16 %v2642
    %v2839 = vunpack.c.l.b16 %v2643
    %v2840 = vunpack.c.l.b16 %v2644
    %v2841 = vunpack.c.l.b16 %v2645
    %v2842 = vunpack.c.l.b16 %v2646
    %v2843 = vunpack.c.l.b16 %v2647
    %v2844 = vunpack.c.l.b16 %v2648
    %v2845 = vunpack.c.l.b16 %v2649
    %v2846 = vunpack.c.l.b16 %v2650
    %v2847 = vunpack.c.l.b16 %v2651
    %v2848 = vunpack.c.l.b16 %v2652
    %v2849 = vunpack.c.l.b16 %v2653
    %v2850 = vunpack.c.l.b16 %v2654
    %v2851 = vunpack.c.l.b16 %v2655
    %v2852 = vunpack.c.l.b16 %v2656
    %v2853 = vunpack.c.l.b16 %v2657
    %v2854 = vunpack.c.l.b16 %v2658
    %v2855 = vunpack.c.l.b16 %v2659
    %v2856 = vunpack.c.l.b16 %v2660
    %v2857 = vunpack.c.l.b16 %v2661
    %v2858 = vunpack.c.l.b16 %v2662
    %v2859 = vunpack.c.l.b16 %v2663
    %v2860 = vunpack.c.l.b16 %v2664
    %v2861 = vunpack.c.l.b16 %v2665
    %v2862 = vunpack.c.l.b16 %v2666
    %v2863 = vunpack.c.l.b16 %v2667
    %v2864 = vunpack.c.l.b16 %v2668
    %v2865 = vunpack.c.l.b16 %v2669
    %v2866 = vunpack.c.l.b16 %v2670
    %v2867 = vunpack.c.l.b16 %v2671
    %v2868 = vunpack.c.l.b16 %v2672
    %v2869 = vunpack.c.l.b16 %v2673
    %v2870 = vunpack.c.l.b16 %v2674
    %v2871 = vunpack.c.l.b16 %v2675
    %v2872 = vunpack.c.l.b16 %v2676
    %v2873 = vunpack.c.l.b16 %v2677
    %v2874 = vunpack.c.l.b16 %v2678
    %v2875 = vunpack.c.l.b16 %v2679
    %v2876 = vunpack.c.l.b16 %v2680
    %v2877 = vpack.c.b16 %v2782, %v2781
    %v2878 = vpack.c.b16 %v2784, %v2783
    %v2879 = vpack.c.b16 %v2786, %v2785
    %v2880 = vpack.c.b16 %v2788, %v2787
    %v2881 = vpack.c.b16 %v2790, %v2789
    %v2882 = vpack.c.b16 %v2792, %v2791
    %v2883 = vpack.c.b16 %v2794, %v2793
    %v2884 = vpack.c.b16 %v2796, %v2795
    %v2885 = vpack.c.b16 %v2798, %v2797
    %v2886 = vpack.c.b16 %v2800, %v2799
    %v2887 = vpack.c.b16 %v2802, %v2801
    %v2888 = vpack.c.b16 %v2804, %v2803
    %v2889 = vpack.c.b16 %v2806, %v2805
    %v2890 = vpack.c.b16 %v2808, %v2807
    %v2891 = vpack.c.b16 %v2810, %v2809
    %v2892 = vpack.c.b16 %v2812, %v2811
    %v2893 = vpack.c.b16 %v2814, %v2813
    %v2894 = vpack.c.b16 %v2816, %v2815
    %v2895 = vpack.c.b16 %v2818, %v2817
    %v2896 = vpack.c.b16 %v2820, %v2819
    %v2897 = vpack.c.b16 %v2822, %v2821
    %v2898 = vpack.c.b16 %v2824, %v2823
    %v2899 = vpack.c.b16 %v2826, %v2825
    %v2900 = vpack.c.b16 %v2828, %v2827
    %v2901 = vpack.c.b16 %v2830, %v2829
    %v2902 = vpack.c.b16 %v2832, %v2831
    %v2903 = vpack.c.b16 %v2834, %v2833
    %v2904 = vpack.c.b16 %v2836, %v2835
    %v2905 = vpack.c.b16 %v2838, %v2837
    %v2906 = vpack.c.b16 %v2840, %v2839
    %v2907 = vpack.c.b16 %v2842, %v2841
    %v2908 = vpack.c.b16 %v2844, %v2843
    %v2909 = vpack.c.b16 %v2846, %v2845
    %v2910 = vpack.c.b16 %v2848, %v2847
    %v2911 = vpack.c.b16 %v2850, %v2849
    %v2912 = vpack.c.b16 %v2852, %v2851
    %v2913 = vpack.c.b16 %v2854, %v2853
    %v2914 = vpack.c.b16 %v2856, %v2855
    %v2915 = vpack.c.b16 %v2858, %v2857
    %v2916 = vpack.c.b16 %v2860, %v2859
    %v2917 = vpack.c.b16 %v2862, %v2861
    %v2918 = vpack.c.b16 %v2864, %v2863
    %v2919 = vpack.c.b16 %v2866, %v2865
    %v2920 = vpack.c.b16 %v2868, %v2867
    %v2921 = vpack.c.b16 %v2870, %v2869
    %v2922 = vpack.c.b16 %v2872, %v2871
    %v2923 = vpack.c.b16 %v2874, %v2873
    %v2924 = vpack.c.b16 %v2876, %v2875
    %2973 = vmatpush.bf16.msra.mxu0 %v2884
    %2974 = vmatpush.bf16.msra.mxu0 %v2883
    %2975 = vmatpush.bf16.msra.mxu0 %v2882
    %2976 = vmatpush.bf16.msra.mxu0 %v2881
    %2977 = vmatpush.bf16.msra.mxu0 %v2880
    %2978 = vmatpush.bf16.msra.mxu0 %v2879
    %2979 = vmatpush.bf16.msra.mxu0 %v2878
    %2980 = vmatpush.bf16.msra.mxu0 %v2877
    %2981 = vmatmul.bf16.gmra.mxu0 %v2579
    %v2982 = vpop.f32.mrf.mxu0
    %v2983 = vadd.f32 %v2683, %v2982
    %v2984 = vpop.f32.mrf.mxu0
    %2985 = vdwg.mxu0
    %2986 = vmatpush.bf16.msra.mxu0 %v2892
    %2987 = vmatpush.bf16.msra.mxu0 %v2891
    %2988 = vmatpush.bf16.msra.mxu0 %v2890
    %2989 = vmatpush.bf16.msra.mxu0 %v2889
    %2990 = vmatpush.bf16.msra.mxu0 %v2888
    %2991 = vmatpush.bf16.msra.mxu0 %v2887
    %2992 = vmatpush.bf16.msra.mxu0 %v2886
    %2993 = vmatpush.bf16.msra.mxu0 %v2885
    %2994 = vmatmul.bf16.gmra.mxu0 %v2580
    %v2995 = vpop.f32.mrf.mxu0
    %v2996 = vadd.f32 %v2983, %v2995
    %v2997 = vpop.f32.mrf.mxu0
    %2998 = vdwg.mxu0
    %2999 = vmatpush.bf16.msra.mxu0 %v2900
    %3000 = vmatpush.bf16.msra.mxu0 %v2899
    %3001 = vmatpush.bf16.msra.mxu0 %v2898
    %3002 = vmatpush.bf16.msra.mxu0 %v2897
    %3003 = vmatpush.bf16.msra.mxu0 %v2896
    %3004 = vmatpush.bf16.msra.mxu0 %v2895
    %3005 = vmatpush.bf16.msra.mxu0 %v2894
    %3006 = vmatpush.bf16.msra.mxu0 %v2893
    %3007 = vmatmul.bf16.gmra.mxu0 %v2581
    %v3008 = vpop.f32.mrf.mxu0
    %v3009 = vadd.f32 %v2996, %v3008
    %v3010 = vpop.f32.mrf.mxu0
    %3011 = vdwg.mxu0
    %3012 = vmatpush.bf16.msra.mxu0 %v2908
    %3013 = vmatpush.bf16.msra.mxu0 %v2907
    %3014 = vmatpush.bf16.msra.mxu0 %v2906
    %3015 = vmatpush.bf16.msra.mxu0 %v2905
    %3016 = vmatpush.bf16.msra.mxu0 %v2904
    %3017 = vmatpush.bf16.msra.mxu0 %v2903
    %3018 = vmatpush.bf16.msra.mxu0 %v2902
    %3019 = vmatpush.bf16.msra.mxu0 %v2901
    %3020 = vmatmul.bf16.gmra.mxu0 %v2582
    %v3021 = vpop.f32.mrf.mxu0
    %v3022 = vadd.f32 %v3009, %v3021
    %v3023 = vpop.f32.mrf.mxu0
    %3024 = vdwg.mxu0
    %3025 = vmatpush.bf16.msra.mxu0 %v2916
    %3026 = vmatpush.bf16.msra.mxu0 %v2915
    %3027 = vmatpush.bf16.msra.mxu0 %v2914
    %3028 = vmatpush.bf16.msra.mxu0 %v2913
    %3029 = vmatpush.bf16.msra.mxu0 %v2912
    %3030 = vmatpush.bf16.msra.mxu0 %v2911
    %3031 = vmatpush.bf16.msra.mxu0 %v2910
    %3032 = vmatpush.bf16.msra.mxu0 %v2909
    %3033 = vmatmul.bf16.gmra.mxu0 %v2583
    %v3034 = vpop.f32.mrf.mxu0
    %v3035 = vadd.f32 %v3022, %v3034
    %v3036 = vpop.f32.mrf.mxu0
    %3037 = vdwg.mxu0
    %3038 = vmatpush.bf16.msra.mxu0 %v2924
    %3039 = vmatpush.bf16.msra.mxu0 %v2923
    %3040 = vmatpush.bf16.msra.mxu0 %v2922
    %3041 = vmatpush.bf16.msra.mxu0 %v2921
    %3042 = vmatpush.bf16.msra.mxu0 %v2920
    %3043 = vmatpush.bf16.msra.mxu0 %v2919
    %3044 = vmatpush.bf16.msra.mxu0 %v2918
    %3045 = vmatpush.bf16.msra.mxu0 %v2917
    %3046 = vmatmul.bf16.gmra.mxu0 %v2584
    %v3047 = vpop.f32.mrf.mxu0
    %v3048 = vadd.f32 %v3035, %v3047
    %v3049 = vpop.f32.mrf.mxu0
    %3050 = vdwg.mxu0
    %3051 = vst [vmem:[#allocation11] sm:$0xff] %v3048
    // Predicated region
    $region42: #{tpu_custom_call.1} parent=1 // pred_check
      _
    $region43: #{tpu_custom_call.1} parent=1 // pred_check_branch
      %3053 = sbr.rel (0) target = $region45
    $region44: #{tpu_custom_call.1} parent=1 // pred_region
      %3055 = vsyncadd [#allocation4], 0
      %s3057 = sshll.u32 [#allocation11], 4
      %s3058 = int_to_ptr.vmem [resolvable:$true] %s3057
      %s3059 = sshll.u32 %s5, 4
      %s3060 = int_to_ptr.hbm [resolvable:$true] %s3059
      %3062 = dma.vmem_to_hbm [thread:$0]  %s3058, 128, %s3060, [#allocation4]
    $region45: #{tpu_custom_call.1} parent=1 // pred_fallthru
      _
    // Predicated region
    $region46: #{tpu_custom_call.1} parent=1 // pred_check
      _
    $region47: #{tpu_custom_call.1} parent=1 // pred_check_branch
      %3064 = sbr.rel (0) target = $region49
    $region48: #{tpu_custom_call.1} parent=1 // pred_region
      %3066 = dma.done [#allocation4], 128
    $region49: #{tpu_custom_call.1} parent=1 // pred_fallthru
      _
    %3067 = vsyncpa [#allocation3], 1
    %3068 = vsyncpa [#allocation6], 1
    %3069 = vsyncpa [#allocation9], 1
    %3070 = vsyncpa [#allocation4], 1

</llo_original>
